<compile_context>
chip_gen: v7x
topology: tpu7x:2x2x1
jax: 0.10.0
libtpu: 0.0.40
codegen_flags: <defaults>
</compile_context>

<pallas_src>
import functools

import jax
import jax.numpy as jnp
from jax.experimental import pallas as pl
from jax.experimental.pallas import tpu as pltpu

dropout_rate = 0.174424886
hidden_dim = 206
num_layers = 7

HIDDEN_PAD = 256   # 206 -> 256: lane-dense hidden width (multiple of 128)
OUT_PAD = 128      # 2   -> 128: lane-dense final store, sliced back outside


def _round_up(x, m):
    return (x + m - 1) // m * m


def _fused_mlp_kernel(x_ref, w_in_ref, b_in_ref, w_h_ref, b_h_ref,
                      w_out_ref, b_out_ref, o_ref, *, n_hidden):
    # Layer 0: (TB, Din) @ (Din, Hp) + b -> ReLU.
    # bf16 MXU inputs, f32 accumulation; bias/ReLU stay in f32 (v5e-safe).
    h = jnp.dot(x_ref[...].astype(jnp.bfloat16), w_in_ref[...],
                preferred_element_type=jnp.float32)
    h = jnp.maximum(h + b_in_ref[...], 0.0)
    # Dropout == identity (eval mode).

    # 6 hidden layers, fully unrolled; weights resident in VMEM across the grid.
    for i in range(n_hidden):
        h = jnp.dot(h.astype(jnp.bfloat16), w_h_ref[i],
                    preferred_element_type=jnp.float32)
        h = jnp.maximum(h + b_h_ref[i], 0.0)

    # Final layer (no ReLU), written lane-dense into the 128-wide padded output.
    y = jnp.dot(h.astype(jnp.bfloat16), w_out_ref[...],
                preferred_element_type=jnp.float32) + b_out_ref[...]
    o_ref[...] = y.astype(o_ref.dtype)


def net_forward_fused(packed, x, *, batch_tile=256):
    """Single-launch fused forward pass, batch-tiled. Returns (B, 2) logits."""
    w_in, b_in, w_h, b_h, w_out, b_out = packed
    B, Din = x.shape
    n_hidden = w_h.shape[0]

    # Batch tile: multiple of 8 (sublane), capped at `batch_tile`. Pad the batch
    # up to a whole number of tiles; padded rows are sliced off at the end.
    TB = min(batch_tile, _round_up(B, 8))
    B_pad = _round_up(B, TB)
    if B_pad != B:
        x = jnp.pad(x, ((0, B_pad - B), (0, 0)))

    kernel = functools.partial(_fused_mlp_kernel, n_hidden=n_hidden)

    flops = 2 * B_pad * (Din * HIDDEN_PAD
                         + n_hidden * HIDDEN_PAD * HIDDEN_PAD
                         + HIDDEN_PAD * OUT_PAD)
    bytes_accessed = (4 * x.size
                      + 2 * (w_in.size + w_h.size + w_out.size)     # bf16 weights
                      + 4 * (b_in.size + b_h.size + b_out.size)     # f32 biases
                      + 4 * B_pad * OUT_PAD)

    out_pad = pl.pallas_call(
        kernel,
        out_shape=jax.ShapeDtypeStruct((B_pad, OUT_PAD), jnp.float32),
        grid=(B_pad // TB,),
        in_specs=[
            # Activations: tiled over the batch grid axis.
            pl.BlockSpec((TB, Din), lambda i: (i, 0)),               # x      (TB, Din)
            # Weights/biases: constant block index -> DMA'd once, VMEM-resident.
            pl.BlockSpec(w_in.shape, lambda i: (0, 0)),              # W_in   (Din, Hp)   bf16
            pl.BlockSpec(b_in.shape, lambda i: (0, 0)),              # b_in   (1, Hp)     f32
            pl.BlockSpec(w_h.shape, lambda i: (0, 0, 0)),            # W_h    (nh, Hp, Hp) bf16
            pl.BlockSpec(b_h.shape, lambda i: (0, 0, 0)),            # b_h    (nh, 1, Hp)  f32
            pl.BlockSpec(w_out.shape, lambda i: (0, 0)),             # W_out  (Hp, OUT_PAD) bf16
            pl.BlockSpec(b_out.shape, lambda i: (0, 0)),             # b_out  (1, OUT_PAD)  f32
        ],
        out_specs=pl.BlockSpec((TB, OUT_PAD), lambda i: (i, 0)),
        compiler_params=pltpu.CompilerParams(
            dimension_semantics=("parallel",)),                      # megacore split on v7x
        cost_estimate=pl.CostEstimate(
            flops=flops, transcendentals=0, bytes_accessed=bytes_accessed),
    )(x, w_in, b_in, w_h, b_h, w_out, b_out)

    return out_pad[:B, :2]


def init_net_params(key, input_dim, hidden, n_layers):
    """Deterministic PyTorch-style init: U(-1/sqrt(fan_in), 1/sqrt(fan_in)).

    Weights stored as (in_features, out_features) so y = x @ W + b directly.
    """
    dims = [input_dim] + [hidden] * n_layers + [2]
    params = []
    for i in range(len(dims) - 1):
        fan_in, fan_out = dims[i], dims[i + 1]
        key, kw, kb = jax.random.split(key, 3)
        bound = 1.0 / jnp.sqrt(jnp.float32(fan_in))
        w = jax.random.uniform(kw, (fan_in, fan_out), jnp.float32, -bound, bound)
        bvec = jax.random.uniform(kb, (fan_out,), jnp.float32, -bound, bound)
        params.append((w, bvec))
    return params


def pack_params(params):
    """Zero-pad + stack PyTorch-layout params into the lane-dense fused layout.

    Weights are emitted in bf16 (halves the dominant HBM weight stream), biases
    stay f32 (added in f32 on the VPU). Zero padding is mathematically exact.
    """
    (w0, b0) = params[0]
    hidden_ws = params[1:-1]
    (wl, bl) = params[-1]
    din, h = w0.shape
    n_hidden = len(hidden_ws)
    out_dim = wl.shape[1]

    w_in = jnp.zeros((din, HIDDEN_PAD), jnp.bfloat16).at[:, :h].set(w0)
    b_in = jnp.zeros((1, HIDDEN_PAD), jnp.float32).at[0, :h].set(b0)

    w_h = jnp.zeros((n_hidden, HIDDEN_PAD, HIDDEN_PAD), jnp.bfloat16)
    b_h = jnp.zeros((n_hidden, 1, HIDDEN_PAD), jnp.float32)
    for i, (w, b) in enumerate(hidden_ws):
        w_h = w_h.at[i, :h, :h].set(w)
        b_h = b_h.at[i, 0, :h].set(b)

    w_out = jnp.zeros((HIDDEN_PAD, OUT_PAD), jnp.bfloat16).at[:h, :out_dim].set(wl)
    b_out = jnp.zeros((1, OUT_PAD), jnp.float32).at[0, :out_dim].set(bl)

    return (w_in, b_in, w_h, b_h, w_out, b_out)


def _reference_forward(params, x):
    """Plain-JAX reference mirroring the kernel numerics: bf16 dot inputs,
    f32 accumulation, f32 bias/ReLU."""
    ref = x
    for i, (w, b) in enumerate(params):
        ref = jnp.dot(ref.astype(jnp.bfloat16), w.astype(jnp.bfloat16),
                      preferred_element_type=jnp.float32) + b
        if i != len(params) - 1:
            ref = jnp.maximum(ref, 0.0)
    return ref


if __name__ == "__main__":
    input_dim = 16
    batch = 8

    key = jax.random.PRNGKey(0)
    key, kx, kx2 = jax.random.split(key, 3)
    x = jax.random.normal(kx, (batch, input_dim), jnp.float32)

    params = init_net_params(key, input_dim, hidden_dim, num_layers)
    packed = pack_params(params)  # padded/stacked/bf16-cast once, reused every call

    fwd = jax.jit(net_forward_fused)

    # Small batch (single grid tile).
    out = jax.block_until_ready(fwd(packed, x))
    assert out.shape == (batch, 2), out.shape
    ref = _reference_forward(params, x)
    assert jnp.allclose(out, ref, atol=2e-3, rtol=2e-3), (
        float(jnp.max(jnp.abs(out - ref))))

    # Larger, non-multiple batch (exercises the batch grid + padding path).
    batch2 = 300
    x2 = jax.random.normal(kx2, (batch2, input_dim), jnp.float32)
    out2 = jax.block_until_ready(fwd(packed, x2))
    assert out2.shape == (batch2, 2), out2.shape
    ref2 = _reference_forward(params, x2)
    assert jnp.allclose(out2, ref2, atol=2e-3, rtol=2e-3), (
        float(jnp.max(jnp.abs(out2 - ref2))))

    print("KERNEL_OK")
</pallas_src>

<mosaic_0001>
module attributes {stable_mosaic.version = 11 : i64} {
  func.func @_fused_mlp_kernel(%arg0: i32, %arg1: memref<8x16xf32, #tpu.memory_space<vmem>>, %arg2: memref<16x256xbf16, #tpu.memory_space<vmem>>, %arg3: memref<1x256xf32, #tpu.memory_space<vmem>>, %arg4: memref<6x256x256xbf16, #tpu.memory_space<vmem>>, %arg5: memref<6x1x256xf32, #tpu.memory_space<vmem>>, %arg6: memref<256x128xbf16, #tpu.memory_space<vmem>>, %arg7: memref<1x128xf32, #tpu.memory_space<vmem>>, %arg8: memref<8x128xf32, #tpu.memory_space<vmem>>) attributes {dimension_semantics = [#tpu.dimension_semantics<parallel>], iteration_bounds = array<i64: 1>, scalar_prefetch = 0 : i64, scratch_operands = 0 : i64, tpu.core_type = #tpu.core_type<tc>, window_params = [{transform_indices = @transform_0, window_bounds = array<i64: 8, 16>}, {pipeline_mode = #tpu.pipeline_mode<synchronous>, transform_indices = @transform_1, window_bounds = array<i64: 16, 256>}, {pipeline_mode = #tpu.pipeline_mode<synchronous>, transform_indices = @transform_2, window_bounds = array<i64: 1, 256>}, {pipeline_mode = #tpu.pipeline_mode<synchronous>, transform_indices = @transform_3, window_bounds = array<i64: 6, 256, 256>}, {pipeline_mode = #tpu.pipeline_mode<synchronous>, transform_indices = @transform_4, window_bounds = array<i64: 6, 1, 256>}, {pipeline_mode = #tpu.pipeline_mode<synchronous>, transform_indices = @transform_5, window_bounds = array<i64: 256, 128>}, {pipeline_mode = #tpu.pipeline_mode<synchronous>, transform_indices = @transform_6, window_bounds = array<i64: 1, 128>}, {transform_indices = @transform_7, window_bounds = array<i64: 8, 128>}]} {
    %c0 = arith.constant 0 : index
    %c0_0 = arith.constant 0 : index
    %0 = vector.load %arg1[%c0, %c0_0] : memref<8x16xf32, #tpu.memory_space<vmem>>, vector<8x16xf32>
    %1 = arith.truncf %0 : vector<8x16xf32> to vector<8x16xbf16>
    %c0_1 = arith.constant 0 : index
    %c0_2 = arith.constant 0 : index
    %2 = vector.load %arg2[%c0_1, %c0_2] : memref<16x256xbf16, #tpu.memory_space<vmem>>, vector<16x256xbf16>
    %cst = arith.constant dense<0.000000e+00> : vector<8x256xf32>
    %3 = tpu.matmul %1, %2, %cst {dimension_numbers = #tpu.dot_dimension_numbers<[1], [0], [0], [1], [0, 0, 1, 1], [], []>} : vector<8x16xbf16>, vector<16x256xbf16>, vector<8x256xf32> -> vector<8x256xf32>
    %c0_3 = arith.constant 0 : index
    %c0_4 = arith.constant 0 : index
    %4 = vector.load %arg3[%c0_3, %c0_4] : memref<1x256xf32, #tpu.memory_space<vmem>>, vector<1x256xf32>
    %5 = vector.broadcast %4 : vector<1x256xf32> to vector<8x256xf32>
    %6 = arith.addf %3, %5 : vector<8x256xf32>
    %cst_5 = arith.constant 0.000000e+00 : f32
    %7 = vector.broadcast %cst_5 : f32 to vector<8x256xf32>
    %8 = arith.maximumf %6, %7 : vector<8x256xf32>
    %9 = arith.truncf %8 : vector<8x256xf32> to vector<8x256xbf16>
    %c0_6 = arith.constant 0 : index
    %c0_7 = arith.constant 0 : index
    %c0_8 = arith.constant 0 : index
    %10 = vector.load %arg4[%c0_6, %c0_7, %c0_8] : memref<6x256x256xbf16, #tpu.memory_space<vmem>>, vector<1x256x256xbf16>
    %11 = vector.shape_cast %10 : vector<1x256x256xbf16> to vector<256x256xbf16>
    %cst_9 = arith.constant dense<0.000000e+00> : vector<8x256xf32>
    %12 = tpu.matmul %9, %11, %cst_9 {dimension_numbers = #tpu.dot_dimension_numbers<[1], [0], [0], [1], [0, 0, 1, 1], [], []>} : vector<8x256xbf16>, vector<256x256xbf16>, vector<8x256xf32> -> vector<8x256xf32>
    %c0_10 = arith.constant 0 : index
    %c0_11 = arith.constant 0 : index
    %c0_12 = arith.constant 0 : index
    %13 = vector.load %arg5[%c0_10, %c0_11, %c0_12] : memref<6x1x256xf32, #tpu.memory_space<vmem>>, vector<1x1x256xf32>
    %14 = vector.shape_cast %13 : vector<1x1x256xf32> to vector<1x256xf32>
    %15 = vector.broadcast %14 : vector<1x256xf32> to vector<8x256xf32>
    %16 = arith.addf %12, %15 : vector<8x256xf32>
    %cst_13 = arith.constant 0.000000e+00 : f32
    %17 = vector.broadcast %cst_13 : f32 to vector<8x256xf32>
    %18 = arith.maximumf %16, %17 : vector<8x256xf32>
    %19 = arith.truncf %18 : vector<8x256xf32> to vector<8x256xbf16>
    %c1 = arith.constant 1 : index
    %c0_14 = arith.constant 0 : index
    %c0_15 = arith.constant 0 : index
    %20 = vector.load %arg4[%c1, %c0_14, %c0_15] : memref<6x256x256xbf16, #tpu.memory_space<vmem>>, vector<1x256x256xbf16>
    %21 = vector.shape_cast %20 : vector<1x256x256xbf16> to vector<256x256xbf16>
    %cst_16 = arith.constant dense<0.000000e+00> : vector<8x256xf32>
    %22 = tpu.matmul %19, %21, %cst_16 {dimension_numbers = #tpu.dot_dimension_numbers<[1], [0], [0], [1], [0, 0, 1, 1], [], []>} : vector<8x256xbf16>, vector<256x256xbf16>, vector<8x256xf32> -> vector<8x256xf32>
    %c1_17 = arith.constant 1 : index
    %c0_18 = arith.constant 0 : index
    %c0_19 = arith.constant 0 : index
    %23 = vector.load %arg5[%c1_17, %c0_18, %c0_19] : memref<6x1x256xf32, #tpu.memory_space<vmem>>, vector<1x1x256xf32>
    %24 = vector.shape_cast %23 : vector<1x1x256xf32> to vector<1x256xf32>
    %25 = vector.broadcast %24 : vector<1x256xf32> to vector<8x256xf32>
    %26 = arith.addf %22, %25 : vector<8x256xf32>
    %cst_20 = arith.constant 0.000000e+00 : f32
    %27 = vector.broadcast %cst_20 : f32 to vector<8x256xf32>
    %28 = arith.maximumf %26, %27 : vector<8x256xf32>
    %29 = arith.truncf %28 : vector<8x256xf32> to vector<8x256xbf16>
    %c2 = arith.constant 2 : index
    %c0_21 = arith.constant 0 : index
    %c0_22 = arith.constant 0 : index
    %30 = vector.load %arg4[%c2, %c0_21, %c0_22] : memref<6x256x256xbf16, #tpu.memory_space<vmem>>, vector<1x256x256xbf16>
    %31 = vector.shape_cast %30 : vector<1x256x256xbf16> to vector<256x256xbf16>
    %cst_23 = arith.constant dense<0.000000e+00> : vector<8x256xf32>
    %32 = tpu.matmul %29, %31, %cst_23 {dimension_numbers = #tpu.dot_dimension_numbers<[1], [0], [0], [1], [0, 0, 1, 1], [], []>} : vector<8x256xbf16>, vector<256x256xbf16>, vector<8x256xf32> -> vector<8x256xf32>
    %c2_24 = arith.constant 2 : index
    %c0_25 = arith.constant 0 : index
    %c0_26 = arith.constant 0 : index
    %33 = vector.load %arg5[%c2_24, %c0_25, %c0_26] : memref<6x1x256xf32, #tpu.memory_space<vmem>>, vector<1x1x256xf32>
    %34 = vector.shape_cast %33 : vector<1x1x256xf32> to vector<1x256xf32>
    %35 = vector.broadcast %34 : vector<1x256xf32> to vector<8x256xf32>
    %36 = arith.addf %32, %35 : vector<8x256xf32>
    %cst_27 = arith.constant 0.000000e+00 : f32
    %37 = vector.broadcast %cst_27 : f32 to vector<8x256xf32>
    %38 = arith.maximumf %36, %37 : vector<8x256xf32>
    %39 = arith.truncf %38 : vector<8x256xf32> to vector<8x256xbf16>
    %c3 = arith.constant 3 : index
    %c0_28 = arith.constant 0 : index
    %c0_29 = arith.constant 0 : index
    %40 = vector.load %arg4[%c3, %c0_28, %c0_29] : memref<6x256x256xbf16, #tpu.memory_space<vmem>>, vector<1x256x256xbf16>
    %41 = vector.shape_cast %40 : vector<1x256x256xbf16> to vector<256x256xbf16>
    %cst_30 = arith.constant dense<0.000000e+00> : vector<8x256xf32>
    %42 = tpu.matmul %39, %41, %cst_30 {dimension_numbers = #tpu.dot_dimension_numbers<[1], [0], [0], [1], [0, 0, 1, 1], [], []>} : vector<8x256xbf16>, vector<256x256xbf16>, vector<8x256xf32> -> vector<8x256xf32>
    %c3_31 = arith.constant 3 : index
    %c0_32 = arith.constant 0 : index
    %c0_33 = arith.constant 0 : index
    %43 = vector.load %arg5[%c3_31, %c0_32, %c0_33] : memref<6x1x256xf32, #tpu.memory_space<vmem>>, vector<1x1x256xf32>
    %44 = vector.shape_cast %43 : vector<1x1x256xf32> to vector<1x256xf32>
    %45 = vector.broadcast %44 : vector<1x256xf32> to vector<8x256xf32>
    %46 = arith.addf %42, %45 : vector<8x256xf32>
    %cst_34 = arith.constant 0.000000e+00 : f32
    %47 = vector.broadcast %cst_34 : f32 to vector<8x256xf32>
    %48 = arith.maximumf %46, %47 : vector<8x256xf32>
    %49 = arith.truncf %48 : vector<8x256xf32> to vector<8x256xbf16>
    %c4 = arith.constant 4 : index
    %c0_35 = arith.constant 0 : index
    %c0_36 = arith.constant 0 : index
    %50 = vector.load %arg4[%c4, %c0_35, %c0_36] : memref<6x256x256xbf16, #tpu.memory_space<vmem>>, vector<1x256x256xbf16>
    %51 = vector.shape_cast %50 : vector<1x256x256xbf16> to vector<256x256xbf16>
    %cst_37 = arith.constant dense<0.000000e+00> : vector<8x256xf32>
    %52 = tpu.matmul %49, %51, %cst_37 {dimension_numbers = #tpu.dot_dimension_numbers<[1], [0], [0], [1], [0, 0, 1, 1], [], []>} : vector<8x256xbf16>, vector<256x256xbf16>, vector<8x256xf32> -> vector<8x256xf32>
    %c4_38 = arith.constant 4 : index
    %c0_39 = arith.constant 0 : index
    %c0_40 = arith.constant 0 : index
    %53 = vector.load %arg5[%c4_38, %c0_39, %c0_40] : memref<6x1x256xf32, #tpu.memory_space<vmem>>, vector<1x1x256xf32>
    %54 = vector.shape_cast %53 : vector<1x1x256xf32> to vector<1x256xf32>
    %55 = vector.broadcast %54 : vector<1x256xf32> to vector<8x256xf32>
    %56 = arith.addf %52, %55 : vector<8x256xf32>
    %cst_41 = arith.constant 0.000000e+00 : f32
    %57 = vector.broadcast %cst_41 : f32 to vector<8x256xf32>
    %58 = arith.maximumf %56, %57 : vector<8x256xf32>
    %59 = arith.truncf %58 : vector<8x256xf32> to vector<8x256xbf16>
    %c5 = arith.constant 5 : index
    %c0_42 = arith.constant 0 : index
    %c0_43 = arith.constant 0 : index
    %60 = vector.load %arg4[%c5, %c0_42, %c0_43] : memref<6x256x256xbf16, #tpu.memory_space<vmem>>, vector<1x256x256xbf16>
    %61 = vector.shape_cast %60 : vector<1x256x256xbf16> to vector<256x256xbf16>
    %cst_44 = arith.constant dense<0.000000e+00> : vector<8x256xf32>
    %62 = tpu.matmul %59, %61, %cst_44 {dimension_numbers = #tpu.dot_dimension_numbers<[1], [0], [0], [1], [0, 0, 1, 1], [], []>} : vector<8x256xbf16>, vector<256x256xbf16>, vector<8x256xf32> -> vector<8x256xf32>
    %c5_45 = arith.constant 5 : index
    %c0_46 = arith.constant 0 : index
    %c0_47 = arith.constant 0 : index
    %63 = vector.load %arg5[%c5_45, %c0_46, %c0_47] : memref<6x1x256xf32, #tpu.memory_space<vmem>>, vector<1x1x256xf32>
    %64 = vector.shape_cast %63 : vector<1x1x256xf32> to vector<1x256xf32>
    %65 = vector.broadcast %64 : vector<1x256xf32> to vector<8x256xf32>
    %66 = arith.addf %62, %65 : vector<8x256xf32>
    %cst_48 = arith.constant 0.000000e+00 : f32
    %67 = vector.broadcast %cst_48 : f32 to vector<8x256xf32>
    %68 = arith.maximumf %66, %67 : vector<8x256xf32>
    %69 = arith.truncf %68 : vector<8x256xf32> to vector<8x256xbf16>
    %c0_49 = arith.constant 0 : index
    %c0_50 = arith.constant 0 : index
    %70 = vector.load %arg6[%c0_49, %c0_50] : memref<256x128xbf16, #tpu.memory_space<vmem>>, vector<256x128xbf16>
    %cst_51 = arith.constant dense<0.000000e+00> : vector<8x128xf32>
    %71 = tpu.matmul %69, %70, %cst_51 {dimension_numbers = #tpu.dot_dimension_numbers<[1], [0], [0], [1], [0, 0, 1, 1], [], []>} : vector<8x256xbf16>, vector<256x128xbf16>, vector<8x128xf32> -> vector<8x128xf32>
    %c0_52 = arith.constant 0 : index
    %c0_53 = arith.constant 0 : index
    %72 = vector.load %arg7[%c0_52, %c0_53] : memref<1x128xf32, #tpu.memory_space<vmem>>, vector<1x128xf32>
    %73 = vector.broadcast %72 : vector<1x128xf32> to vector<8x128xf32>
    %74 = arith.addf %71, %73 : vector<8x128xf32>
    %c0_54 = arith.constant 0 : index
    %c0_55 = arith.constant 0 : index
    %75 = vector.load %arg8[%c0_54, %c0_55] : memref<8x128xf32, #tpu.memory_space<vmem>>, vector<8x128xf32>
    tpu.vector_store %arg8[%c0_54, %c0_55], %74 {strides = array<i32>} : memref<8x128xf32, #tpu.memory_space<vmem>>, vector<8x128xf32>,
    return
  }
  func.func @transform_0(%arg0: i32) -> (i32, i32) {
    %c0_i32 = arith.constant 0 : i32
    %c0_i32_0 = arith.constant 0 : i32
    return %arg0, %c0_i32 : i32, i32
  }
  func.func @transform_1(%arg0: i32) -> (i32, i32) {
    %c0_i32 = arith.constant 0 : i32
    %c0_i32_0 = arith.constant 0 : i32
    %c0_i32_1 = arith.constant 0 : i32
    return %c0_i32, %c0_i32_0 : i32, i32
  }
  func.func @transform_2(%arg0: i32) -> (i32, i32) {
    %c0_i32 = arith.constant 0 : i32
    %c0_i32_0 = arith.constant 0 : i32
    %c0_i32_1 = arith.constant 0 : i32
    return %c0_i32, %c0_i32_0 : i32, i32
  }
  func.func @transform_3(%arg0: i32) -> (i32, i32, i32) {
    %c0_i32 = arith.constant 0 : i32
    %c0_i32_0 = arith.constant 0 : i32
    %c0_i32_1 = arith.constant 0 : i32
    %c0_i32_2 = arith.constant 0 : i32
    return %c0_i32, %c0_i32_0, %c0_i32_1 : i32, i32, i32
  }
  func.func @transform_4(%arg0: i32) -> (i32, i32, i32) {
    %c0_i32 = arith.constant 0 : i32
    %c0_i32_0 = arith.constant 0 : i32
    %c0_i32_1 = arith.constant 0 : i32
    %c0_i32_2 = arith.constant 0 : i32
    return %c0_i32, %c0_i32_0, %c0_i32_1 : i32, i32, i32
  }
  func.func @transform_5(%arg0: i32) -> (i32, i32) {
    %c0_i32 = arith.constant 0 : i32
    %c0_i32_0 = arith.constant 0 : i32
    %c0_i32_1 = arith.constant 0 : i32
    return %c0_i32, %c0_i32_0 : i32, i32
  }
  func.func @transform_6(%arg0: i32) -> (i32, i32) {
    %c0_i32 = arith.constant 0 : i32
    %c0_i32_0 = arith.constant 0 : i32
    %c0_i32_1 = arith.constant 0 : i32
    return %c0_i32, %c0_i32_0 : i32, i32
  }
  func.func @transform_7(%arg0: i32) -> (i32, i32) {
    %c0_i32 = arith.constant 0 : i32
    %c0_i32_0 = arith.constant 0 : i32
    return %arg0, %c0_i32 : i32, i32
  }
}

</mosaic_0001>

<llo_original>
// kernel: net_forward_fused.1
$region0: #{net_forward_fused.1}
  #allocation0 [shape = 'u32[]', space=smem, size = 0x4, offset = 0x4, fixed_abs, tag = 'smem constant byte address 0x4 - core index']
  #allocation1 [shape = 'u32[144,128]{1,0:T(1,128)}', space=vmem, size = 0x12000, scoped, tag = 'internal scratch']
  %s0 = inlined_call_operand.vmem [shape: f32[8,16], index: 0, kind: input, shape index: {}]
  %s1 = inlined_call_operand.hbm [shape: bf16[16,256], index: 1, kind: input, shape index: {}]
  %s2 = inlined_call_operand.vmem [shape: f32[1,256], index: 2, kind: input, shape index: {}]
  %s3 = inlined_call_operand.hbm [shape: bf16[6,256,256], index: 3, kind: input, shape index: {}]
  %s4 = inlined_call_operand.hbm [shape: f32[6,1,256], index: 4, kind: input, shape index: {}]
  %s5 = inlined_call_operand.hbm [shape: bf16[256,128], index: 5, kind: input, shape index: {}]
  %s6 = inlined_call_operand.vmem [shape: f32[1,128], index: 6, kind: input, shape index: {}]
  %s7 = inlined_call_operand.vmem [shape: f32[8,128], index: 7, kind: output, shape index: {}]
  %s8 = sld [smem:[#allocation0]]
  $region54: #{net_forward_fused.1} parent=0
    _
  %s10 = ssub.s32 1, %s8
  %s11 = scalar_select 0, %s10, %s8
  $region1: #{net_forward_fused.1} parent=0
    #allocation2 [shape = 'u8[8192]{0}', space=vmem, size = 0x2000, scoped, tag = 'input window, operand 1, single buffered']
    #allocation3 [shape = 's32[1]{0}', space=sflag, size = 0x4, scoped, tag = 'scoped memory for net_forward_fused.1']
    #allocation4 [shape = 'u8[786432]{0}', space=vmem, size = 0xc0000, scoped, tag = 'input window, operand 3, single buffered']
    #allocation5 [shape = 's32[1]{0}', space=sflag, size = 0x4, scoped, tag = 'scoped memory for net_forward_fused.1']
    #allocation6 [shape = 'u8[6144]{0}', space=vmem, size = 0x1800, scoped, tag = 'input window, operand 4, single buffered']
    #allocation7 [shape = 'u8[65536]{0}', space=vmem, size = 0x10000, scoped, tag = 'input window, operand 5, single buffered']
    #allocation8 [shape = 's32[1]{0}', space=sflag, size = 0x4, scoped, tag = 'scoped memory for net_forward_fused.1']
    %12 = vsyncpa [#allocation3], 0
    %13 = vsyncpa [#allocation5], 0
    %14 = vsyncpa [#allocation8], 0
    // Predicated region
    $region2: #{net_forward_fused.1} parent=1 // pred_check
      _
    $region3: #{net_forward_fused.1} parent=1 // pred_check_branch
      %16 = sbr.rel (0) target = $region5
    $region4: #{net_forward_fused.1} parent=1 // pred_region
      _
    $region5: #{net_forward_fused.1} parent=1 // pred_fallthru
      _
    // Predicated region
    $region6: #{net_forward_fused.1} parent=1 // pred_check
      _
    $region7: #{net_forward_fused.1} parent=1 // pred_check_branch
      %18 = sbr.rel (0) target = $region9
    $region8: #{net_forward_fused.1} parent=1 // pred_region
      %s20 = ssub.s32 256, 256
      %21 = vsyncadd [#allocation3], %s20
      %s22 = sshll.u32 [#allocation2], 4
      %s23 = int_to_ptr.vmem [resolvable:$true] %s22
      %28 = dma.hbm_to_vmem [thread:$0]  %s1, 256, %s23, [#allocation3], 128, 128, 8
    $region9: #{net_forward_fused.1} parent=1 // pred_fallthru
      _
    // Predicated region
    $region10: #{net_forward_fused.1} parent=1 // pred_check
      _
    $region11: #{net_forward_fused.1} parent=1 // pred_check_branch
      %30 = sbr.rel (0) target = $region13
    $region12: #{net_forward_fused.1} parent=1 // pred_region
      _
    $region13: #{net_forward_fused.1} parent=1 // pred_fallthru
      _
    // Predicated region
    $region14: #{net_forward_fused.1} parent=1 // pred_check
      _
    $region15: #{net_forward_fused.1} parent=1 // pred_check_branch
      %32 = sbr.rel (0) target = $region17
    $region16: #{net_forward_fused.1} parent=1 // pred_region
      %s34 = ssub.s32 24576, 24576
      %35 = vsyncadd [#allocation5], %s34
      %s36 = sshll.u32 [#allocation4], 4
      %s37 = int_to_ptr.vmem [resolvable:$true] %s36
      %42 = dma.hbm_to_vmem [thread:$0]  %s3, 24576, %s37, [#allocation5], 128, 128, 8
    $region17: #{net_forward_fused.1} parent=1 // pred_fallthru
      _
    // Predicated region
    $region18: #{net_forward_fused.1} parent=1 // pred_check
      _
    $region19: #{net_forward_fused.1} parent=1 // pred_check_branch
      %44 = sbr.rel (0) target = $region21
    $region20: #{net_forward_fused.1} parent=1 // pred_region
      %s46 = ssub.s32 192, 192
      %47 = vsyncadd [#allocation5], %s46
      %s48 = sshll.u32 [#allocation6], 4
      %s49 = int_to_ptr.vmem [resolvable:$true] %s48
      %54 = dma.hbm_to_vmem [thread:$0]  %s4, 192, %s49, [#allocation5], 32, 32, 2
    $region21: #{net_forward_fused.1} parent=1 // pred_fallthru
      _
    // Predicated region
    $region22: #{net_forward_fused.1} parent=1 // pred_check
      _
    $region23: #{net_forward_fused.1} parent=1 // pred_check_branch
      %56 = sbr.rel (0) target = $region25
    $region24: #{net_forward_fused.1} parent=1 // pred_region
      %s58 = ssub.s32 2048, 2048
      %59 = vsyncadd [#allocation8], %s58
      %s60 = sshll.u32 [#allocation7], 4
      %s61 = int_to_ptr.vmem [resolvable:$true] %s60
      %66 = dma.hbm_to_vmem [thread:$0]  %s5, 2048, %s61, [#allocation8], 64, 64, 4
    $region25: #{net_forward_fused.1} parent=1 // pred_fallthru
      _
    // Predicated region
    $region26: #{net_forward_fused.1} parent=1 // pred_check
      _
    $region27: #{net_forward_fused.1} parent=1 // pred_check_branch
      %68 = sbr.rel (0) target = $region29
    $region28: #{net_forward_fused.1} parent=1 // pred_region
      _
    $region29: #{net_forward_fused.1} parent=1 // pred_fallthru
      _
    // Predicated region
    $region30: #{net_forward_fused.1} parent=1 // pred_check
      _
    $region31: #{net_forward_fused.1} parent=1 // pred_check_branch
      %70 = sbr.rel (0) target = $region33
    $region32: #{net_forward_fused.1} parent=1 // pred_region
      %71 = dma.done [#allocation3], 256
    $region33: #{net_forward_fused.1} parent=1 // pred_fallthru
      _
    // Predicated region
    $region34: #{net_forward_fused.1} parent=1 // pred_check
      _
    $region35: #{net_forward_fused.1} parent=1 // pred_check_branch
      %73 = sbr.rel (0) target = $region37
    $region36: #{net_forward_fused.1} parent=1 // pred_region
      %74 = dma.done [#allocation5], 24576
    $region37: #{net_forward_fused.1} parent=1 // pred_fallthru
      _
    // Predicated region
    $region38: #{net_forward_fused.1} parent=1 // pred_check
      _
    $region39: #{net_forward_fused.1} parent=1 // pred_check_branch
      %76 = sbr.rel (0) target = $region41
    $region40: #{net_forward_fused.1} parent=1 // pred_region
      %77 = dma.done [#allocation5], 192
    $region41: #{net_forward_fused.1} parent=1 // pred_fallthru
      _
    // Predicated region
    $region42: #{net_forward_fused.1} parent=1 // pred_check
      _
    $region43: #{net_forward_fused.1} parent=1 // pred_check_branch
      %79 = sbr.rel (0) target = $region45
    $region44: #{net_forward_fused.1} parent=1 // pred_region
      %80 = dma.done [#allocation8], 2048
    $region45: #{net_forward_fused.1} parent=1 // pred_fallthru
      _
    %v82 = vld [vmem:[%s0] sm:$0xff]
    %v83 = vpack.c.bf16 %v82, %v82
    %v84 = vld [vmem:[#allocation2] sm:$0xff]
    %v85 = vld [vmem:[#allocation2 + $0x8] sm:$0xff]
    %v86 = vld [vmem:[%s2] sm:$0x3]
    %v88 = vlaneseq
    %v89 = vshrl.u32 %v88, 7
    %v90 = vsub.s32 0, %v89
    %v91 = vrot.slane %v86, %v90
    %v92 = vlaneseq
    %v93 = vshrl.u32 %v92, 7
    %v94 = vsub.s32 1, %v93
    %v95 = vrot.slane %v86, %v94
    %v100 = vunpack.c.l.b16 %v84
    %v101 = vunpack.c.h.b16 %v84
    %v102 = vunpack.c.l.b16 %v85
    %v103 = vunpack.c.h.b16 %v85
    %v104 = vpack.c.b16 %v102, %v100
    %v105 = vpack.c.b16 %v103, %v101
    %vm108 = vcmask 130048
    %v110 = vsel %vm108, %v83, 0
    %112 = vmatprep.subr.bf16.mxu0 %v105
    %113 = vmatpush1.bf16.msra.mxu0 %v104
    %114 = vmatprep.subr.bf16.mxu0 0
    %115 = vmatpush1.bf16.msra.mxu0 0
    %116 = vmatprep.subr.bf16.mxu0 0
    %117 = vmatpush1.bf16.msra.mxu0 0
    %118 = vmatprep.subr.bf16.mxu0 0
    %119 = vmatpush1.bf16.msra.mxu0 0
    %120 = vmatprep.subr.bf16.mxu0 0
    %121 = vmatpush1.bf16.msra.mxu0 0
    %122 = vmatprep.subr.bf16.mxu0 0
    %123 = vmatpush1.bf16.msra.mxu0 0
    %124 = vmatprep.subr.bf16.mxu0 0
    %125 = vmatpush1.bf16.msra.mxu0 0
    %126 = vmatprep.subr.bf16.mxu0 0
    %127 = vmatpush1.bf16.msra.mxu0 0
    %128 = vmatprep.subr.bf16.mxu0 0
    %129 = vmatpush1.bf16.msra.mxu0 0
    %130 = vmatprep.subr.bf16.mxu0 0
    %131 = vmatpush1.bf16.msra.mxu0 0
    %132 = vmatprep.subr.bf16.mxu0 0
    %133 = vmatpush1.bf16.msra.mxu0 0
    %134 = vmatprep.subr.bf16.mxu0 0
    %135 = vmatpush1.bf16.msra.mxu0 0
    %136 = vmatprep.subr.bf16.mxu0 0
    %137 = vmatpush1.bf16.msra.mxu0 0
    %138 = vmatprep.subr.bf16.mxu0 0
    %139 = vmatpush1.bf16.msra.mxu0 0
    %140 = vmatprep.subr.bf16.mxu0 0
    %141 = vmatpush1.bf16.msra.mxu0 0
    %142 = vmatprep.subr.bf16.mxu0 0
    %143 = vmatpush1.bf16.msra.mxu0 0
    %144 = vmatprep.mubr.bf16.mxu0 0
    %145 = vmatmul.mubr.bf16.gmra.mrb[0].mxu0 %v110
    %v146 = vpop.f32.mrb[0].mxu0
    %v147 = vadd.f32 %v91, %v146
    %v148 = vpop.f32.mrb[0].mxu0
    %v149 = vadd.f32 %v95, %v148
    %v150 = vpop.f32.mrb[0].mxu0
    %v151 = vpop.f32.mrb[0].mxu0
    %152 = vdwg.mxu0
    %v153 = vmax.f32 %v147, 0.0
    %v154 = vmax.f32 %v149, 0.0
    %v155 = vpack.c.bf16 %v153, %v153
    %v156 = vpack.c.bf16 %v154, %v154
    %v157 = vld [vmem:[#allocation4] sm:$0xff]
    %v158 = vld [vmem:[#allocation4 + $0x8] sm:$0xff]
    %v159 = vld [vmem:[#allocation4 + $0x10] sm:$0xff]
    %v160 = vld [vmem:[#allocation4 + $0x18] sm:$0xff]
    %v161 = vld [vmem:[#allocation4 + $0x20] sm:$0xff]
    %v162 = vld [vmem:[#allocation4 + $0x28] sm:$0xff]
    %v163 = vld [vmem:[#allocation4 + $0x30] sm:$0xff]
    %v164 = vld [vmem:[#allocation4 + $0x38] sm:$0xff]
    %v165 = vld [vmem:[#allocation4 + $0x40] sm:$0xff]
    %v166 = vld [vmem:[#allocation4 + $0x48] sm:$0xff]
    %v167 = vld [vmem:[#allocation4 + $0x50] sm:$0xff]
    %v168 = vld [vmem:[#allocation4 + $0x58] sm:$0xff]
    %v169 = vld [vmem:[#allocation4 + $0x60] sm:$0xff]
    %v170 = vld [vmem:[#allocation4 + $0x68] sm:$0xff]
    %v171 = vld [vmem:[#allocation4 + $0x70] sm:$0xff]
    %v172 = vld [vmem:[#allocation4 + $0x78] sm:$0xff]
    %v173 = vld [vmem:[#allocation4 + $0x80] sm:$0xff]
    %v174 = vld [vmem:[#allocation4 + $0x88] sm:$0xff]
    %v175 = vld [vmem:[#allocation4 + $0x90] sm:$0xff]
    %v176 = vld [vmem:[#allocation4 + $0x98] sm:$0xff]
    %v177 = vld [vmem:[#allocation4 + $0xa0] sm:$0xff]
    %v178 = vld [vmem:[#allocation4 + $0xa8] sm:$0xff]
    %v179 = vld [vmem:[#allocation4 + $0xb0] sm:$0xff]
    %v180 = vld [vmem:[#allocation4 + $0xb8] sm:$0xff]
    %v181 = vld [vmem:[#allocation4 + $0xc0] sm:$0xff]
    %v182 = vld [vmem:[#allocation4 + $0xc8] sm:$0xff]
    %v183 = vld [vmem:[#allocation4 + $0xd0] sm:$0xff]
    %v184 = vld [vmem:[#allocation4 + $0xd8] sm:$0xff]
    %v185 = vld [vmem:[#allocation4 + $0xe0] sm:$0xff]
    %v186 = vld [vmem:[#allocation4 + $0xe8] sm:$0xff]
    %v187 = vld [vmem:[#allocation4 + $0xf0] sm:$0xff]
    %v188 = vld [vmem:[#allocation4 + $0xf8] sm:$0xff]
    %v189 = vld [vmem:[#allocation6] sm:$0x3]
    %v191 = vlaneseq
    %v192 = vshrl.u32 %v191, 7
    %v193 = vsub.s32 0, %v192
    %v194 = vrot.slane %v189, %v193
    %v195 = vlaneseq
    %v196 = vshrl.u32 %v195, 7
    %v197 = vsub.s32 1, %v196
    %v198 = vrot.slane %v189, %v197
    %v233 = vunpack.c.l.b16 %v157
    %v234 = vunpack.c.h.b16 %v157
    %v235 = vunpack.c.l.b16 %v158
    %v236 = vunpack.c.h.b16 %v158
    %v237 = vunpack.c.l.b16 %v159
    %v238 = vunpack.c.h.b16 %v159
    %v239 = vunpack.c.l.b16 %v160
    %v240 = vunpack.c.h.b16 %v160
    %v241 = vunpack.c.l.b16 %v161
    %v242 = vunpack.c.h.b16 %v161
    %v243 = vunpack.c.l.b16 %v162
    %v244 = vunpack.c.h.b16 %v162
    %v245 = vunpack.c.l.b16 %v163
    %v246 = vunpack.c.h.b16 %v163
    %v247 = vunpack.c.l.b16 %v164
    %v248 = vunpack.c.h.b16 %v164
    %v249 = vunpack.c.l.b16 %v165
    %v250 = vunpack.c.h.b16 %v165
    %v251 = vunpack.c.l.b16 %v166
    %v252 = vunpack.c.h.b16 %v166
    %v253 = vunpack.c.l.b16 %v167
    %v254 = vunpack.c.h.b16 %v167
    %v255 = vunpack.c.l.b16 %v168
    %v256 = vunpack.c.h.b16 %v168
    %v257 = vunpack.c.l.b16 %v169
    %v258 = vunpack.c.h.b16 %v169
    %v259 = vunpack.c.l.b16 %v170
    %v260 = vunpack.c.h.b16 %v170
    %v261 = vunpack.c.l.b16 %v171
    %v262 = vunpack.c.h.b16 %v171
    %v263 = vunpack.c.l.b16 %v172
    %v264 = vunpack.c.h.b16 %v172
    %v265 = vunpack.c.l.b16 %v173
    %v266 = vunpack.c.h.b16 %v173
    %v267 = vunpack.c.l.b16 %v174
    %v268 = vunpack.c.h.b16 %v174
    %v269 = vunpack.c.l.b16 %v175
    %v270 = vunpack.c.h.b16 %v175
    %v271 = vunpack.c.l.b16 %v176
    %v272 = vunpack.c.h.b16 %v176
    %v273 = vunpack.c.l.b16 %v177
    %v274 = vunpack.c.h.b16 %v177
    %v275 = vunpack.c.l.b16 %v178
    %v276 = vunpack.c.h.b16 %v178
    %v277 = vunpack.c.l.b16 %v179
    %v278 = vunpack.c.h.b16 %v179
    %v279 = vunpack.c.l.b16 %v180
    %v280 = vunpack.c.h.b16 %v180
    %v281 = vunpack.c.l.b16 %v181
    %v282 = vunpack.c.h.b16 %v181
    %v283 = vunpack.c.l.b16 %v182
    %v284 = vunpack.c.h.b16 %v182
    %v285 = vunpack.c.l.b16 %v183
    %v286 = vunpack.c.h.b16 %v183
    %v287 = vunpack.c.l.b16 %v184
    %v288 = vunpack.c.h.b16 %v184
    %v289 = vunpack.c.l.b16 %v185
    %v290 = vunpack.c.h.b16 %v185
    %v291 = vunpack.c.l.b16 %v186
    %v292 = vunpack.c.h.b16 %v186
    %v293 = vunpack.c.l.b16 %v187
    %v294 = vunpack.c.h.b16 %v187
    %v295 = vunpack.c.l.b16 %v188
    %v296 = vunpack.c.h.b16 %v188
    %v297 = vpack.c.b16 %v235, %v233
    %v298 = vpack.c.b16 %v236, %v234
    %v299 = vpack.c.b16 %v239, %v237
    %v300 = vpack.c.b16 %v240, %v238
    %v301 = vpack.c.b16 %v243, %v241
    %v302 = vpack.c.b16 %v244, %v242
    %v303 = vpack.c.b16 %v247, %v245
    %v304 = vpack.c.b16 %v248, %v246
    %v305 = vpack.c.b16 %v251, %v249
    %v306 = vpack.c.b16 %v252, %v250
    %v307 = vpack.c.b16 %v255, %v253
    %v308 = vpack.c.b16 %v256, %v254
    %v309 = vpack.c.b16 %v259, %v257
    %v310 = vpack.c.b16 %v260, %v258
    %v311 = vpack.c.b16 %v263, %v261
    %v312 = vpack.c.b16 %v264, %v262
    %v313 = vpack.c.b16 %v267, %v265
    %v314 = vpack.c.b16 %v268, %v266
    %v315 = vpack.c.b16 %v271, %v269
    %v316 = vpack.c.b16 %v272, %v270
    %v317 = vpack.c.b16 %v275, %v273
    %v318 = vpack.c.b16 %v276, %v274
    %v319 = vpack.c.b16 %v279, %v277
    %v320 = vpack.c.b16 %v280, %v278
    %v321 = vpack.c.b16 %v283, %v281
    %v322 = vpack.c.b16 %v284, %v282
    %v323 = vpack.c.b16 %v287, %v285
    %v324 = vpack.c.b16 %v288, %v286
    %v325 = vpack.c.b16 %v291, %v289
    %v326 = vpack.c.b16 %v292, %v290
    %v327 = vpack.c.b16 %v295, %v293
    %v328 = vpack.c.b16 %v296, %v294
    %361 = vmatprep.subr.bf16.mxu0 %v298
    %362 = vmatpush1.bf16.msra.mxu0 %v297
    %363 = vmatprep.subr.bf16.mxu0 %v300
    %364 = vmatpush1.bf16.msra.mxu0 %v299
    %365 = vmatprep.subr.bf16.mxu0 %v302
    %366 = vmatpush1.bf16.msra.mxu0 %v301
    %367 = vmatprep.subr.bf16.mxu0 %v304
    %368 = vmatpush1.bf16.msra.mxu0 %v303
    %369 = vmatprep.subr.bf16.mxu0 %v306
    %370 = vmatpush1.bf16.msra.mxu0 %v305
    %371 = vmatprep.subr.bf16.mxu0 %v308
    %372 = vmatpush1.bf16.msra.mxu0 %v307
    %373 = vmatprep.subr.bf16.mxu0 %v310
    %374 = vmatpush1.bf16.msra.mxu0 %v309
    %375 = vmatprep.subr.bf16.mxu0 %v312
    %376 = vmatpush1.bf16.msra.mxu0 %v311
    %377 = vmatprep.subr.bf16.mxu0 %v314
    %378 = vmatpush1.bf16.msra.mxu0 %v313
    %379 = vmatprep.subr.bf16.mxu0 %v316
    %380 = vmatpush1.bf16.msra.mxu0 %v315
    %381 = vmatprep.subr.bf16.mxu0 %v318
    %382 = vmatpush1.bf16.msra.mxu0 %v317
    %383 = vmatprep.subr.bf16.mxu0 %v320
    %384 = vmatpush1.bf16.msra.mxu0 %v319
    %385 = vmatprep.subr.bf16.mxu0 %v322
    %386 = vmatpush1.bf16.msra.mxu0 %v321
    %387 = vmatprep.subr.bf16.mxu0 %v324
    %388 = vmatpush1.bf16.msra.mxu0 %v323
    %389 = vmatprep.subr.bf16.mxu0 %v326
    %390 = vmatpush1.bf16.msra.mxu0 %v325
    %391 = vmatprep.subr.bf16.mxu0 %v328
    %392 = vmatpush1.bf16.msra.mxu0 %v327
    %393 = vmatprep.mubr.bf16.mxu0 %v156
    %394 = vmatmul.mubr.bf16.gmra.mrb[0].mxu0 %v155
    %v395 = vpop.f32.mrb[0].mxu0
    %v396 = vadd.f32 %v194, %v395
    %v397 = vpop.f32.mrb[0].mxu0
    %v398 = vadd.f32 %v198, %v397
    %v399 = vpop.f32.mrb[0].mxu0
    %v400 = vpop.f32.mrb[0].mxu0
    %401 = vdwg.mxu0
    %v402 = vmax.f32 %v396, 0.0
    %v403 = vmax.f32 %v398, 0.0
    %v404 = vpack.c.bf16 %v402, %v402
    %v405 = vpack.c.bf16 %v403, %v403
    %s406 = scalar_lea.vmem [#allocation4], 256
    %v407 = vld [vmem:[%s406] sm:$0xff]
    %v408 = vld [vmem:[%s406 + $0x8] sm:$0xff]
    %v409 = vld [vmem:[%s406 + $0x10] sm:$0xff]
    %v410 = vld [vmem:[%s406 + $0x18] sm:$0xff]
    %v411 = vld [vmem:[%s406 + $0x20] sm:$0xff]
    %v412 = vld [vmem:[%s406 + $0x28] sm:$0xff]
    %v413 = vld [vmem:[%s406 + $0x30] sm:$0xff]
    %v414 = vld [vmem:[%s406 + $0x38] sm:$0xff]
    %v415 = vld [vmem:[%s406 + $0x40] sm:$0xff]
    %v416 = vld [vmem:[%s406 + $0x48] sm:$0xff]
    %v417 = vld [vmem:[%s406 + $0x50] sm:$0xff]
    %v418 = vld [vmem:[%s406 + $0x58] sm:$0xff]
    %v419 = vld [vmem:[%s406 + $0x60] sm:$0xff]
    %v420 = vld [vmem:[%s406 + $0x68] sm:$0xff]
    %v421 = vld [vmem:[%s406 + $0x70] sm:$0xff]
    %v422 = vld [vmem:[%s406 + $0x78] sm:$0xff]
    %v423 = vld [vmem:[%s406 + $0x80] sm:$0xff]
    %v424 = vld [vmem:[%s406 + $0x88] sm:$0xff]
    %v425 = vld [vmem:[%s406 + $0x90] sm:$0xff]
    %v426 = vld [vmem:[%s406 + $0x98] sm:$0xff]
    %v427 = vld [vmem:[%s406 + $0xa0] sm:$0xff]
    %v428 = vld [vmem:[%s406 + $0xa8] sm:$0xff]
    %v429 = vld [vmem:[%s406 + $0xb0] sm:$0xff]
    %v430 = vld [vmem:[%s406 + $0xb8] sm:$0xff]
    %v431 = vld [vmem:[%s406 + $0xc0] sm:$0xff]
    %v432 = vld [vmem:[%s406 + $0xc8] sm:$0xff]
    %v433 = vld [vmem:[%s406 + $0xd0] sm:$0xff]
    %v434 = vld [vmem:[%s406 + $0xd8] sm:$0xff]
    %v435 = vld [vmem:[%s406 + $0xe0] sm:$0xff]
    %v436 = vld [vmem:[%s406 + $0xe8] sm:$0xff]
    %v437 = vld [vmem:[%s406 + $0xf0] sm:$0xff]
    %v438 = vld [vmem:[%s406 + $0xf8] sm:$0xff]
    %s439 = scalar_lea.vmem [#allocation6], 2
    %v440 = vld [vmem:[%s439] sm:$0x3]
    %v442 = vlaneseq
    %v443 = vshrl.u32 %v442, 7
    %v444 = vsub.s32 0, %v443
    %v445 = vrot.slane %v440, %v444
    %v446 = vlaneseq
    %v447 = vshrl.u32 %v446, 7
    %v448 = vsub.s32 1, %v447
    %v449 = vrot.slane %v440, %v448
    %v484 = vunpack.c.l.b16 %v407
    %v485 = vunpack.c.h.b16 %v407
    %v486 = vunpack.c.l.b16 %v408
    %v487 = vunpack.c.h.b16 %v408
    %v488 = vunpack.c.l.b16 %v409
    %v489 = vunpack.c.h.b16 %v409
    %v490 = vunpack.c.l.b16 %v410
    %v491 = vunpack.c.h.b16 %v410
    %v492 = vunpack.c.l.b16 %v411
    %v493 = vunpack.c.h.b16 %v411
    %v494 = vunpack.c.l.b16 %v412
    %v495 = vunpack.c.h.b16 %v412
    %v496 = vunpack.c.l.b16 %v413
    %v497 = vunpack.c.h.b16 %v413
    %v498 = vunpack.c.l.b16 %v414
    %v499 = vunpack.c.h.b16 %v414
    %v500 = vunpack.c.l.b16 %v415
    %v501 = vunpack.c.h.b16 %v415
    %v502 = vunpack.c.l.b16 %v416
    %v503 = vunpack.c.h.b16 %v416
    %v504 = vunpack.c.l.b16 %v417
    %v505 = vunpack.c.h.b16 %v417
    %v506 = vunpack.c.l.b16 %v418
    %v507 = vunpack.c.h.b16 %v418
    %v508 = vunpack.c.l.b16 %v419
    %v509 = vunpack.c.h.b16 %v419
    %v510 = vunpack.c.l.b16 %v420
    %v511 = vunpack.c.h.b16 %v420
    %v512 = vunpack.c.l.b16 %v421
    %v513 = vunpack.c.h.b16 %v421
    %v514 = vunpack.c.l.b16 %v422
    %v515 = vunpack.c.h.b16 %v422
    %v516 = vunpack.c.l.b16 %v423
    %v517 = vunpack.c.h.b16 %v423
    %v518 = vunpack.c.l.b16 %v424
    %v519 = vunpack.c.h.b16 %v424
    %v520 = vunpack.c.l.b16 %v425
    %v521 = vunpack.c.h.b16 %v425
    %v522 = vunpack.c.l.b16 %v426
    %v523 = vunpack.c.h.b16 %v426
    %v524 = vunpack.c.l.b16 %v427
    %v525 = vunpack.c.h.b16 %v427
    %v526 = vunpack.c.l.b16 %v428
    %v527 = vunpack.c.h.b16 %v428
    %v528 = vunpack.c.l.b16 %v429
    %v529 = vunpack.c.h.b16 %v429
    %v530 = vunpack.c.l.b16 %v430
    %v531 = vunpack.c.h.b16 %v430
    %v532 = vunpack.c.l.b16 %v431
    %v533 = vunpack.c.h.b16 %v431
    %v534 = vunpack.c.l.b16 %v432
    %v535 = vunpack.c.h.b16 %v432
    %v536 = vunpack.c.l.b16 %v433
    %v537 = vunpack.c.h.b16 %v433
    %v538 = vunpack.c.l.b16 %v434
    %v539 = vunpack.c.h.b16 %v434
    %v540 = vunpack.c.l.b16 %v435
    %v541 = vunpack.c.h.b16 %v435
    %v542 = vunpack.c.l.b16 %v436
    %v543 = vunpack.c.h.b16 %v436
    %v544 = vunpack.c.l.b16 %v437
    %v545 = vunpack.c.h.b16 %v437
    %v546 = vunpack.c.l.b16 %v438
    %v547 = vunpack.c.h.b16 %v438
    %v548 = vpack.c.b16 %v486, %v484
    %v549 = vpack.c.b16 %v487, %v485
    %v550 = vpack.c.b16 %v490, %v488
    %v551 = vpack.c.b16 %v491, %v489
    %v552 = vpack.c.b16 %v494, %v492
    %v553 = vpack.c.b16 %v495, %v493
    %v554 = vpack.c.b16 %v498, %v496
    %v555 = vpack.c.b16 %v499, %v497
    %v556 = vpack.c.b16 %v502, %v500
    %v557 = vpack.c.b16 %v503, %v501
    %v558 = vpack.c.b16 %v506, %v504
    %v559 = vpack.c.b16 %v507, %v505
    %v560 = vpack.c.b16 %v510, %v508
    %v561 = vpack.c.b16 %v511, %v509
    %v562 = vpack.c.b16 %v514, %v512
    %v563 = vpack.c.b16 %v515, %v513
    %v564 = vpack.c.b16 %v518, %v516
    %v565 = vpack.c.b16 %v519, %v517
    %v566 = vpack.c.b16 %v522, %v520
    %v567 = vpack.c.b16 %v523, %v521
    %v568 = vpack.c.b16 %v526, %v524
    %v569 = vpack.c.b16 %v527, %v525
    %v570 = vpack.c.b16 %v530, %v528
    %v571 = vpack.c.b16 %v531, %v529
    %v572 = vpack.c.b16 %v534, %v532
    %v573 = vpack.c.b16 %v535, %v533
    %v574 = vpack.c.b16 %v538, %v536
    %v575 = vpack.c.b16 %v539, %v537
    %v576 = vpack.c.b16 %v542, %v540
    %v577 = vpack.c.b16 %v543, %v541
    %v578 = vpack.c.b16 %v546, %v544
    %v579 = vpack.c.b16 %v547, %v545
    %612 = vmatprep.subr.bf16.mxu0 %v549
    %613 = vmatpush1.bf16.msra.mxu0 %v548
    %614 = vmatprep.subr.bf16.mxu0 %v551
    %615 = vmatpush1.bf16.msra.mxu0 %v550
    %616 = vmatprep.subr.bf16.mxu0 %v553
    %617 = vmatpush1.bf16.msra.mxu0 %v552
    %618 = vmatprep.subr.bf16.mxu0 %v555
    %619 = vmatpush1.bf16.msra.mxu0 %v554
    %620 = vmatprep.subr.bf16.mxu0 %v557
    %621 = vmatpush1.bf16.msra.mxu0 %v556
    %622 = vmatprep.subr.bf16.mxu0 %v559
    %623 = vmatpush1.bf16.msra.mxu0 %v558
    %624 = vmatprep.subr.bf16.mxu0 %v561
    %625 = vmatpush1.bf16.msra.mxu0 %v560
    %626 = vmatprep.subr.bf16.mxu0 %v563
    %627 = vmatpush1.bf16.msra.mxu0 %v562
    %628 = vmatprep.subr.bf16.mxu0 %v565
    %629 = vmatpush1.bf16.msra.mxu0 %v564
    %630 = vmatprep.subr.bf16.mxu0 %v567
    %631 = vmatpush1.bf16.msra.mxu0 %v566
    %632 = vmatprep.subr.bf16.mxu0 %v569
    %633 = vmatpush1.bf16.msra.mxu0 %v568
    %634 = vmatprep.subr.bf16.mxu0 %v571
    %635 = vmatpush1.bf16.msra.mxu0 %v570
    %636 = vmatprep.subr.bf16.mxu0 %v573
    %637 = vmatpush1.bf16.msra.mxu0 %v572
    %638 = vmatprep.subr.bf16.mxu0 %v575
    %639 = vmatpush1.bf16.msra.mxu0 %v574
    %640 = vmatprep.subr.bf16.mxu0 %v577
    %641 = vmatpush1.bf16.msra.mxu0 %v576
    %642 = vmatprep.subr.bf16.mxu0 %v579
    %643 = vmatpush1.bf16.msra.mxu0 %v578
    %644 = vmatprep.mubr.bf16.mxu0 %v405
    %645 = vmatmul.mubr.bf16.gmra.mrb[0].mxu0 %v404
    %v646 = vpop.f32.mrb[0].mxu0
    %v647 = vadd.f32 %v445, %v646
    %v648 = vpop.f32.mrb[0].mxu0
    %v649 = vadd.f32 %v449, %v648
    %v650 = vpop.f32.mrb[0].mxu0
    %v651 = vpop.f32.mrb[0].mxu0
    %652 = vdwg.mxu0
    %v653 = vmax.f32 %v647, 0.0
    %v654 = vmax.f32 %v649, 0.0
    %v655 = vpack.c.bf16 %v653, %v653
    %v656 = vpack.c.bf16 %v654, %v654
    %s657 = scalar_lea.vmem [#allocation4], 512
    %v658 = vld [vmem:[%s657] sm:$0xff]
    %v659 = vld [vmem:[%s657 + $0x8] sm:$0xff]
    %v660 = vld [vmem:[%s657 + $0x10] sm:$0xff]
    %v661 = vld [vmem:[%s657 + $0x18] sm:$0xff]
    %v662 = vld [vmem:[%s657 + $0x20] sm:$0xff]
    %v663 = vld [vmem:[%s657 + $0x28] sm:$0xff]
    %v664 = vld [vmem:[%s657 + $0x30] sm:$0xff]
    %v665 = vld [vmem:[%s657 + $0x38] sm:$0xff]
    %v666 = vld [vmem:[%s657 + $0x40] sm:$0xff]
    %v667 = vld [vmem:[%s657 + $0x48] sm:$0xff]
    %v668 = vld [vmem:[%s657 + $0x50] sm:$0xff]
    %v669 = vld [vmem:[%s657 + $0x58] sm:$0xff]
    %v670 = vld [vmem:[%s657 + $0x60] sm:$0xff]
    %v671 = vld [vmem:[%s657 + $0x68] sm:$0xff]
    %v672 = vld [vmem:[%s657 + $0x70] sm:$0xff]
    %v673 = vld [vmem:[%s657 + $0x78] sm:$0xff]
    %v674 = vld [vmem:[%s657 + $0x80] sm:$0xff]
    %v675 = vld [vmem:[%s657 + $0x88] sm:$0xff]
    %v676 = vld [vmem:[%s657 + $0x90] sm:$0xff]
    %v677 = vld [vmem:[%s657 + $0x98] sm:$0xff]
    %v678 = vld [vmem:[%s657 + $0xa0] sm:$0xff]
    %v679 = vld [vmem:[%s657 + $0xa8] sm:$0xff]
    %v680 = vld [vmem:[%s657 + $0xb0] sm:$0xff]
    %v681 = vld [vmem:[%s657 + $0xb8] sm:$0xff]
    %v682 = vld [vmem:[%s657 + $0xc0] sm:$0xff]
    %v683 = vld [vmem:[%s657 + $0xc8] sm:$0xff]
    %v684 = vld [vmem:[%s657 + $0xd0] sm:$0xff]
    %v685 = vld [vmem:[%s657 + $0xd8] sm:$0xff]
    %v686 = vld [vmem:[%s657 + $0xe0] sm:$0xff]
    %v687 = vld [vmem:[%s657 + $0xe8] sm:$0xff]
    %v688 = vld [vmem:[%s657 + $0xf0] sm:$0xff]
    %v689 = vld [vmem:[%s657 + $0xf8] sm:$0xff]
    %s690 = scalar_lea.vmem [#allocation6], 4
    %v691 = vld [vmem:[%s690] sm:$0x3]
    %v693 = vlaneseq
    %v694 = vshrl.u32 %v693, 7
    %v695 = vsub.s32 0, %v694
    %v696 = vrot.slane %v691, %v695
    %v697 = vlaneseq
    %v698 = vshrl.u32 %v697, 7
    %v699 = vsub.s32 1, %v698
    %v700 = vrot.slane %v691, %v699
    %v735 = vunpack.c.l.b16 %v658
    %v736 = vunpack.c.h.b16 %v658
    %v737 = vunpack.c.l.b16 %v659
    %v738 = vunpack.c.h.b16 %v659
    %v739 = vunpack.c.l.b16 %v660
    %v740 = vunpack.c.h.b16 %v660
    %v741 = vunpack.c.l.b16 %v661
    %v742 = vunpack.c.h.b16 %v661
    %v743 = vunpack.c.l.b16 %v662
    %v744 = vunpack.c.h.b16 %v662
    %v745 = vunpack.c.l.b16 %v663
    %v746 = vunpack.c.h.b16 %v663
    %v747 = vunpack.c.l.b16 %v664
    %v748 = vunpack.c.h.b16 %v664
    %v749 = vunpack.c.l.b16 %v665
    %v750 = vunpack.c.h.b16 %v665
    %v751 = vunpack.c.l.b16 %v666
    %v752 = vunpack.c.h.b16 %v666
    %v753 = vunpack.c.l.b16 %v667
    %v754 = vunpack.c.h.b16 %v667
    %v755 = vunpack.c.l.b16 %v668
    %v756 = vunpack.c.h.b16 %v668
    %v757 = vunpack.c.l.b16 %v669
    %v758 = vunpack.c.h.b16 %v669
    %v759 = vunpack.c.l.b16 %v670
    %v760 = vunpack.c.h.b16 %v670
    %v761 = vunpack.c.l.b16 %v671
    %v762 = vunpack.c.h.b16 %v671
    %v763 = vunpack.c.l.b16 %v672
    %v764 = vunpack.c.h.b16 %v672
    %v765 = vunpack.c.l.b16 %v673
    %v766 = vunpack.c.h.b16 %v673
    %v767 = vunpack.c.l.b16 %v674
    %v768 = vunpack.c.h.b16 %v674
    %v769 = vunpack.c.l.b16 %v675
    %v770 = vunpack.c.h.b16 %v675
    %v771 = vunpack.c.l.b16 %v676
    %v772 = vunpack.c.h.b16 %v676
    %v773 = vunpack.c.l.b16 %v677
    %v774 = vunpack.c.h.b16 %v677
    %v775 = vunpack.c.l.b16 %v678
    %v776 = vunpack.c.h.b16 %v678
    %v777 = vunpack.c.l.b16 %v679
    %v778 = vunpack.c.h.b16 %v679
    %v779 = vunpack.c.l.b16 %v680
    %v780 = vunpack.c.h.b16 %v680
    %v781 = vunpack.c.l.b16 %v681
    %v782 = vunpack.c.h.b16 %v681
    %v783 = vunpack.c.l.b16 %v682
    %v784 = vunpack.c.h.b16 %v682
    %v785 = vunpack.c.l.b16 %v683
    %v786 = vunpack.c.h.b16 %v683
    %v787 = vunpack.c.l.b16 %v684
    %v788 = vunpack.c.h.b16 %v684
    %v789 = vunpack.c.l.b16 %v685
    %v790 = vunpack.c.h.b16 %v685
    %v791 = vunpack.c.l.b16 %v686
    %v792 = vunpack.c.h.b16 %v686
    %v793 = vunpack.c.l.b16 %v687
    %v794 = vunpack.c.h.b16 %v687
    %v795 = vunpack.c.l.b16 %v688
    %v796 = vunpack.c.h.b16 %v688
    %v797 = vunpack.c.l.b16 %v689
    %v798 = vunpack.c.h.b16 %v689
    %v799 = vpack.c.b16 %v737, %v735
    %v800 = vpack.c.b16 %v738, %v736
    %v801 = vpack.c.b16 %v741, %v739
    %v802 = vpack.c.b16 %v742, %v740
    %v803 = vpack.c.b16 %v745, %v743
    %v804 = vpack.c.b16 %v746, %v744
    %v805 = vpack.c.b16 %v749, %v747
    %v806 = vpack.c.b16 %v750, %v748
    %v807 = vpack.c.b16 %v753, %v751
    %v808 = vpack.c.b16 %v754, %v752
    %v809 = vpack.c.b16 %v757, %v755
    %v810 = vpack.c.b16 %v758, %v756
    %v811 = vpack.c.b16 %v761, %v759
    %v812 = vpack.c.b16 %v762, %v760
    %v813 = vpack.c.b16 %v765, %v763
    %v814 = vpack.c.b16 %v766, %v764
    %v815 = vpack.c.b16 %v769, %v767
    %v816 = vpack.c.b16 %v770, %v768
    %v817 = vpack.c.b16 %v773, %v771
    %v818 = vpack.c.b16 %v774, %v772
    %v819 = vpack.c.b16 %v777, %v775
    %v820 = vpack.c.b16 %v778, %v776
    %v821 = vpack.c.b16 %v781, %v779
    %v822 = vpack.c.b16 %v782, %v780
    %v823 = vpack.c.b16 %v785, %v783
    %v824 = vpack.c.b16 %v786, %v784
    %v825 = vpack.c.b16 %v789, %v787
    %v826 = vpack.c.b16 %v790, %v788
    %v827 = vpack.c.b16 %v793, %v791
    %v828 = vpack.c.b16 %v794, %v792
    %v829 = vpack.c.b16 %v797, %v795
    %v830 = vpack.c.b16 %v798, %v796
    %863 = vmatprep.subr.bf16.mxu0 %v800
    %864 = vmatpush1.bf16.msra.mxu0 %v799
    %865 = vmatprep.subr.bf16.mxu0 %v802
    %866 = vmatpush1.bf16.msra.mxu0 %v801
    %867 = vmatprep.subr.bf16.mxu0 %v804
    %868 = vmatpush1.bf16.msra.mxu0 %v803
    %869 = vmatprep.subr.bf16.mxu0 %v806
    %870 = vmatpush1.bf16.msra.mxu0 %v805
    %871 = vmatprep.subr.bf16.mxu0 %v808
    %872 = vmatpush1.bf16.msra.mxu0 %v807
    %873 = vmatprep.subr.bf16.mxu0 %v810
    %874 = vmatpush1.bf16.msra.mxu0 %v809
    %875 = vmatprep.subr.bf16.mxu0 %v812
    %876 = vmatpush1.bf16.msra.mxu0 %v811
    %877 = vmatprep.subr.bf16.mxu0 %v814
    %878 = vmatpush1.bf16.msra.mxu0 %v813
    %879 = vmatprep.subr.bf16.mxu0 %v816
    %880 = vmatpush1.bf16.msra.mxu0 %v815
    %881 = vmatprep.subr.bf16.mxu0 %v818
    %882 = vmatpush1.bf16.msra.mxu0 %v817
    %883 = vmatprep.subr.bf16.mxu0 %v820
    %884 = vmatpush1.bf16.msra.mxu0 %v819
    %885 = vmatprep.subr.bf16.mxu0 %v822
    %886 = vmatpush1.bf16.msra.mxu0 %v821
    %887 = vmatprep.subr.bf16.mxu0 %v824
    %888 = vmatpush1.bf16.msra.mxu0 %v823
    %889 = vmatprep.subr.bf16.mxu0 %v826
    %890 = vmatpush1.bf16.msra.mxu0 %v825
    %891 = vmatprep.subr.bf16.mxu0 %v828
    %892 = vmatpush1.bf16.msra.mxu0 %v827
    %893 = vmatprep.subr.bf16.mxu0 %v830
    %894 = vmatpush1.bf16.msra.mxu0 %v829
    %895 = vmatprep.mubr.bf16.mxu0 %v656
    %896 = vmatmul.mubr.bf16.gmra.mrb[0].mxu0 %v655
    %v897 = vpop.f32.mrb[0].mxu0
    %v898 = vadd.f32 %v696, %v897
    %v899 = vpop.f32.mrb[0].mxu0
    %v900 = vadd.f32 %v700, %v899
    %v901 = vpop.f32.mrb[0].mxu0
    %v902 = vpop.f32.mrb[0].mxu0
    %903 = vdwg.mxu0
    %v904 = vmax.f32 %v898, 0.0
    %v905 = vmax.f32 %v900, 0.0
    %v906 = vpack.c.bf16 %v904, %v904
    %v907 = vpack.c.bf16 %v905, %v905
    %s908 = scalar_lea.vmem [#allocation4], 768
    %v909 = vld [vmem:[%s908] sm:$0xff]
    %v910 = vld [vmem:[%s908 + $0x8] sm:$0xff]
    %v911 = vld [vmem:[%s908 + $0x10] sm:$0xff]
    %v912 = vld [vmem:[%s908 + $0x18] sm:$0xff]
    %v913 = vld [vmem:[%s908 + $0x20] sm:$0xff]
    %v914 = vld [vmem:[%s908 + $0x28] sm:$0xff]
    %v915 = vld [vmem:[%s908 + $0x30] sm:$0xff]
    %v916 = vld [vmem:[%s908 + $0x38] sm:$0xff]
    %v917 = vld [vmem:[%s908 + $0x40] sm:$0xff]
    %v918 = vld [vmem:[%s908 + $0x48] sm:$0xff]
    %v919 = vld [vmem:[%s908 + $0x50] sm:$0xff]
    %v920 = vld [vmem:[%s908 + $0x58] sm:$0xff]
    %v921 = vld [vmem:[%s908 + $0x60] sm:$0xff]
    %v922 = vld [vmem:[%s908 + $0x68] sm:$0xff]
    %v923 = vld [vmem:[%s908 + $0x70] sm:$0xff]
    %v924 = vld [vmem:[%s908 + $0x78] sm:$0xff]
    %v925 = vld [vmem:[%s908 + $0x80] sm:$0xff]
    %v926 = vld [vmem:[%s908 + $0x88] sm:$0xff]
    %v927 = vld [vmem:[%s908 + $0x90] sm:$0xff]
    %v928 = vld [vmem:[%s908 + $0x98] sm:$0xff]
    %v929 = vld [vmem:[%s908 + $0xa0] sm:$0xff]
    %v930 = vld [vmem:[%s908 + $0xa8] sm:$0xff]
    %v931 = vld [vmem:[%s908 + $0xb0] sm:$0xff]
    %v932 = vld [vmem:[%s908 + $0xb8] sm:$0xff]
    %v933 = vld [vmem:[%s908 + $0xc0] sm:$0xff]
    %v934 = vld [vmem:[%s908 + $0xc8] sm:$0xff]
    %v935 = vld [vmem:[%s908 + $0xd0] sm:$0xff]
    %v936 = vld [vmem:[%s908 + $0xd8] sm:$0xff]
    %v937 = vld [vmem:[%s908 + $0xe0] sm:$0xff]
    %v938 = vld [vmem:[%s908 + $0xe8] sm:$0xff]
    %v939 = vld [vmem:[%s908 + $0xf0] sm:$0xff]
    %v940 = vld [vmem:[%s908 + $0xf8] sm:$0xff]
    %s941 = scalar_lea.vmem [#allocation6], 6
    %v942 = vld [vmem:[%s941] sm:$0x3]
    %v944 = vlaneseq
    %v945 = vshrl.u32 %v944, 7
    %v946 = vsub.s32 0, %v945
    %v947 = vrot.slane %v942, %v946
    %v948 = vlaneseq
    %v949 = vshrl.u32 %v948, 7
    %v950 = vsub.s32 1, %v949
    %v951 = vrot.slane %v942, %v950
    %v986 = vunpack.c.l.b16 %v909
    %v987 = vunpack.c.h.b16 %v909
    %v988 = vunpack.c.l.b16 %v910
    %v989 = vunpack.c.h.b16 %v910
    %v990 = vunpack.c.l.b16 %v911
    %v991 = vunpack.c.h.b16 %v911
    %v992 = vunpack.c.l.b16 %v912
    %v993 = vunpack.c.h.b16 %v912
    %v994 = vunpack.c.l.b16 %v913
    %v995 = vunpack.c.h.b16 %v913
    %v996 = vunpack.c.l.b16 %v914
    %v997 = vunpack.c.h.b16 %v914
    %v998 = vunpack.c.l.b16 %v915
    %v999 = vunpack.c.h.b16 %v915
    %v1000 = vunpack.c.l.b16 %v916
    %v1001 = vunpack.c.h.b16 %v916
    %v1002 = vunpack.c.l.b16 %v917
    %v1003 = vunpack.c.h.b16 %v917
    %v1004 = vunpack.c.l.b16 %v918
    %v1005 = vunpack.c.h.b16 %v918
    %v1006 = vunpack.c.l.b16 %v919
    %v1007 = vunpack.c.h.b16 %v919
    %v1008 = vunpack.c.l.b16 %v920
    %v1009 = vunpack.c.h.b16 %v920
    %v1010 = vunpack.c.l.b16 %v921
    %v1011 = vunpack.c.h.b16 %v921
    %v1012 = vunpack.c.l.b16 %v922
    %v1013 = vunpack.c.h.b16 %v922
    %v1014 = vunpack.c.l.b16 %v923
    %v1015 = vunpack.c.h.b16 %v923
    %v1016 = vunpack.c.l.b16 %v924
    %v1017 = vunpack.c.h.b16 %v924
    %v1018 = vunpack.c.l.b16 %v925
    %v1019 = vunpack.c.h.b16 %v925
    %v1020 = vunpack.c.l.b16 %v926
    %v1021 = vunpack.c.h.b16 %v926
    %v1022 = vunpack.c.l.b16 %v927
    %v1023 = vunpack.c.h.b16 %v927
    %v1024 = vunpack.c.l.b16 %v928
    %v1025 = vunpack.c.h.b16 %v928
    %v1026 = vunpack.c.l.b16 %v929
    %v1027 = vunpack.c.h.b16 %v929
    %v1028 = vunpack.c.l.b16 %v930
    %v1029 = vunpack.c.h.b16 %v930
    %v1030 = vunpack.c.l.b16 %v931
    %v1031 = vunpack.c.h.b16 %v931
    %v1032 = vunpack.c.l.b16 %v932
    %v1033 = vunpack.c.h.b16 %v932
    %v1034 = vunpack.c.l.b16 %v933
    %v1035 = vunpack.c.h.b16 %v933
    %v1036 = vunpack.c.l.b16 %v934
    %v1037 = vunpack.c.h.b16 %v934
    %v1038 = vunpack.c.l.b16 %v935
    %v1039 = vunpack.c.h.b16 %v935
    %v1040 = vunpack.c.l.b16 %v936
    %v1041 = vunpack.c.h.b16 %v936
    %v1042 = vunpack.c.l.b16 %v937
    %v1043 = vunpack.c.h.b16 %v937
    %v1044 = vunpack.c.l.b16 %v938
    %v1045 = vunpack.c.h.b16 %v938
    %v1046 = vunpack.c.l.b16 %v939
    %v1047 = vunpack.c.h.b16 %v939
    %v1048 = vunpack.c.l.b16 %v940
    %v1049 = vunpack.c.h.b16 %v940
    %v1050 = vpack.c.b16 %v988, %v986
    %v1051 = vpack.c.b16 %v989, %v987
    %v1052 = vpack.c.b16 %v992, %v990
    %v1053 = vpack.c.b16 %v993, %v991
    %v1054 = vpack.c.b16 %v996, %v994
    %v1055 = vpack.c.b16 %v997, %v995
    %v1056 = vpack.c.b16 %v1000, %v998
    %v1057 = vpack.c.b16 %v1001, %v999
    %v1058 = vpack.c.b16 %v1004, %v1002
    %v1059 = vpack.c.b16 %v1005, %v1003
    %v1060 = vpack.c.b16 %v1008, %v1006
    %v1061 = vpack.c.b16 %v1009, %v1007
    %v1062 = vpack.c.b16 %v1012, %v1010
    %v1063 = vpack.c.b16 %v1013, %v1011
    %v1064 = vpack.c.b16 %v1016, %v1014
    %v1065 = vpack.c.b16 %v1017, %v1015
    %v1066 = vpack.c.b16 %v1020, %v1018
    %v1067 = vpack.c.b16 %v1021, %v1019
    %v1068 = vpack.c.b16 %v1024, %v1022
    %v1069 = vpack.c.b16 %v1025, %v1023
    %v1070 = vpack.c.b16 %v1028, %v1026
    %v1071 = vpack.c.b16 %v1029, %v1027
    %v1072 = vpack.c.b16 %v1032, %v1030
    %v1073 = vpack.c.b16 %v1033, %v1031
    %v1074 = vpack.c.b16 %v1036, %v1034
    %v1075 = vpack.c.b16 %v1037, %v1035
    %v1076 = vpack.c.b16 %v1040, %v1038
    %v1077 = vpack.c.b16 %v1041, %v1039
    %v1078 = vpack.c.b16 %v1044, %v1042
    %v1079 = vpack.c.b16 %v1045, %v1043
    %v1080 = vpack.c.b16 %v1048, %v1046
    %v1081 = vpack.c.b16 %v1049, %v1047
    %1114 = vmatprep.subr.bf16.mxu0 %v1051
    %1115 = vmatpush1.bf16.msra.mxu0 %v1050
    %1116 = vmatprep.subr.bf16.mxu0 %v1053
    %1117 = vmatpush1.bf16.msra.mxu0 %v1052
    %1118 = vmatprep.subr.bf16.mxu0 %v1055
    %1119 = vmatpush1.bf16.msra.mxu0 %v1054
    %1120 = vmatprep.subr.bf16.mxu0 %v1057
    %1121 = vmatpush1.bf16.msra.mxu0 %v1056
    %1122 = vmatprep.subr.bf16.mxu0 %v1059
    %1123 = vmatpush1.bf16.msra.mxu0 %v1058
    %1124 = vmatprep.subr.bf16.mxu0 %v1061
    %1125 = vmatpush1.bf16.msra.mxu0 %v1060
    %1126 = vmatprep.subr.bf16.mxu0 %v1063
    %1127 = vmatpush1.bf16.msra.mxu0 %v1062
    %1128 = vmatprep.subr.bf16.mxu0 %v1065
    %1129 = vmatpush1.bf16.msra.mxu0 %v1064
    %1130 = vmatprep.subr.bf16.mxu0 %v1067
    %1131 = vmatpush1.bf16.msra.mxu0 %v1066
    %1132 = vmatprep.subr.bf16.mxu0 %v1069
    %1133 = vmatpush1.bf16.msra.mxu0 %v1068
    %1134 = vmatprep.subr.bf16.mxu0 %v1071
    %1135 = vmatpush1.bf16.msra.mxu0 %v1070
    %1136 = vmatprep.subr.bf16.mxu0 %v1073
    %1137 = vmatpush1.bf16.msra.mxu0 %v1072
    %1138 = vmatprep.subr.bf16.mxu0 %v1075
    %1139 = vmatpush1.bf16.msra.mxu0 %v1074
    %1140 = vmatprep.subr.bf16.mxu0 %v1077
    %1141 = vmatpush1.bf16.msra.mxu0 %v1076
    %1142 = vmatprep.subr.bf16.mxu0 %v1079
    %1143 = vmatpush1.bf16.msra.mxu0 %v1078
    %1144 = vmatprep.subr.bf16.mxu0 %v1081
    %1145 = vmatpush1.bf16.msra.mxu0 %v1080
    %1146 = vmatprep.mubr.bf16.mxu0 %v907
    %1147 = vmatmul.mubr.bf16.gmra.mrb[0].mxu0 %v906
    %v1148 = vpop.f32.mrb[0].mxu0
    %v1149 = vadd.f32 %v947, %v1148
    %v1150 = vpop.f32.mrb[0].mxu0
    %v1151 = vadd.f32 %v951, %v1150
    %v1152 = vpop.f32.mrb[0].mxu0
    %v1153 = vpop.f32.mrb[0].mxu0
    %1154 = vdwg.mxu0
    %v1155 = vmax.f32 %v1149, 0.0
    %v1156 = vmax.f32 %v1151, 0.0
    %v1157 = vpack.c.bf16 %v1155, %v1155
    %v1158 = vpack.c.bf16 %v1156, %v1156
    %s1159 = scalar_lea.vmem [#allocation4], 1024
    %v1160 = vld [vmem:[%s1159] sm:$0xff]
    %v1161 = vld [vmem:[%s1159 + $0x8] sm:$0xff]
    %v1162 = vld [vmem:[%s1159 + $0x10] sm:$0xff]
    %v1163 = vld [vmem:[%s1159 + $0x18] sm:$0xff]
    %v1164 = vld [vmem:[%s1159 + $0x20] sm:$0xff]
    %v1165 = vld [vmem:[%s1159 + $0x28] sm:$0xff]
    %v1166 = vld [vmem:[%s1159 + $0x30] sm:$0xff]
    %v1167 = vld [vmem:[%s1159 + $0x38] sm:$0xff]
    %v1168 = vld [vmem:[%s1159 + $0x40] sm:$0xff]
    %v1169 = vld [vmem:[%s1159 + $0x48] sm:$0xff]
    %v1170 = vld [vmem:[%s1159 + $0x50] sm:$0xff]
    %v1171 = vld [vmem:[%s1159 + $0x58] sm:$0xff]
    %v1172 = vld [vmem:[%s1159 + $0x60] sm:$0xff]
    %v1173 = vld [vmem:[%s1159 + $0x68] sm:$0xff]
    %v1174 = vld [vmem:[%s1159 + $0x70] sm:$0xff]
    %v1175 = vld [vmem:[%s1159 + $0x78] sm:$0xff]
    %v1176 = vld [vmem:[%s1159 + $0x80] sm:$0xff]
    %v1177 = vld [vmem:[%s1159 + $0x88] sm:$0xff]
    %v1178 = vld [vmem:[%s1159 + $0x90] sm:$0xff]
    %v1179 = vld [vmem:[%s1159 + $0x98] sm:$0xff]
    %v1180 = vld [vmem:[%s1159 + $0xa0] sm:$0xff]
    %v1181 = vld [vmem:[%s1159 + $0xa8] sm:$0xff]
    %v1182 = vld [vmem:[%s1159 + $0xb0] sm:$0xff]
    %v1183 = vld [vmem:[%s1159 + $0xb8] sm:$0xff]
    %v1184 = vld [vmem:[%s1159 + $0xc0] sm:$0xff]
    %v1185 = vld [vmem:[%s1159 + $0xc8] sm:$0xff]
    %v1186 = vld [vmem:[%s1159 + $0xd0] sm:$0xff]
    %v1187 = vld [vmem:[%s1159 + $0xd8] sm:$0xff]
    %v1188 = vld [vmem:[%s1159 + $0xe0] sm:$0xff]
    %v1189 = vld [vmem:[%s1159 + $0xe8] sm:$0xff]
    %v1190 = vld [vmem:[%s1159 + $0xf0] sm:$0xff]
    %v1191 = vld [vmem:[%s1159 + $0xf8] sm:$0xff]
    %s1192 = scalar_lea.vmem [#allocation6], 8
    %v1193 = vld [vmem:[%s1192] sm:$0x3]
    %v1195 = vlaneseq
    %v1196 = vshrl.u32 %v1195, 7
    %v1197 = vsub.s32 0, %v1196
    %v1198 = vrot.slane %v1193, %v1197
    %v1199 = vlaneseq
    %v1200 = vshrl.u32 %v1199, 7
    %v1201 = vsub.s32 1, %v1200
    %v1202 = vrot.slane %v1193, %v1201
    %v1237 = vunpack.c.l.b16 %v1160
    %v1238 = vunpack.c.h.b16 %v1160
    %v1239 = vunpack.c.l.b16 %v1161
    %v1240 = vunpack.c.h.b16 %v1161
    %v1241 = vunpack.c.l.b16 %v1162
    %v1242 = vunpack.c.h.b16 %v1162
    %v1243 = vunpack.c.l.b16 %v1163
    %v1244 = vunpack.c.h.b16 %v1163
    %v1245 = vunpack.c.l.b16 %v1164
    %v1246 = vunpack.c.h.b16 %v1164
    %v1247 = vunpack.c.l.b16 %v1165
    %v1248 = vunpack.c.h.b16 %v1165
    %v1249 = vunpack.c.l.b16 %v1166
    %v1250 = vunpack.c.h.b16 %v1166
    %v1251 = vunpack.c.l.b16 %v1167
    %v1252 = vunpack.c.h.b16 %v1167
    %v1253 = vunpack.c.l.b16 %v1168
    %v1254 = vunpack.c.h.b16 %v1168
    %v1255 = vunpack.c.l.b16 %v1169
    %v1256 = vunpack.c.h.b16 %v1169
    %v1257 = vunpack.c.l.b16 %v1170
    %v1258 = vunpack.c.h.b16 %v1170
    %v1259 = vunpack.c.l.b16 %v1171
    %v1260 = vunpack.c.h.b16 %v1171
    %v1261 = vunpack.c.l.b16 %v1172
    %v1262 = vunpack.c.h.b16 %v1172
    %v1263 = vunpack.c.l.b16 %v1173
    %v1264 = vunpack.c.h.b16 %v1173
    %v1265 = vunpack.c.l.b16 %v1174
    %v1266 = vunpack.c.h.b16 %v1174
    %v1267 = vunpack.c.l.b16 %v1175
    %v1268 = vunpack.c.h.b16 %v1175
    %v1269 = vunpack.c.l.b16 %v1176
    %v1270 = vunpack.c.h.b16 %v1176
    %v1271 = vunpack.c.l.b16 %v1177
    %v1272 = vunpack.c.h.b16 %v1177
    %v1273 = vunpack.c.l.b16 %v1178
    %v1274 = vunpack.c.h.b16 %v1178
    %v1275 = vunpack.c.l.b16 %v1179
    %v1276 = vunpack.c.h.b16 %v1179
    %v1277 = vunpack.c.l.b16 %v1180
    %v1278 = vunpack.c.h.b16 %v1180
    %v1279 = vunpack.c.l.b16 %v1181
    %v1280 = vunpack.c.h.b16 %v1181
    %v1281 = vunpack.c.l.b16 %v1182
    %v1282 = vunpack.c.h.b16 %v1182
    %v1283 = vunpack.c.l.b16 %v1183
    %v1284 = vunpack.c.h.b16 %v1183
    %v1285 = vunpack.c.l.b16 %v1184
    %v1286 = vunpack.c.h.b16 %v1184
    %v1287 = vunpack.c.l.b16 %v1185
    %v1288 = vunpack.c.h.b16 %v1185
    %v1289 = vunpack.c.l.b16 %v1186
    %v1290 = vunpack.c.h.b16 %v1186
    %v1291 = vunpack.c.l.b16 %v1187
    %v1292 = vunpack.c.h.b16 %v1187
    %v1293 = vunpack.c.l.b16 %v1188
    %v1294 = vunpack.c.h.b16 %v1188
    %v1295 = vunpack.c.l.b16 %v1189
    %v1296 = vunpack.c.h.b16 %v1189
    %v1297 = vunpack.c.l.b16 %v1190
    %v1298 = vunpack.c.h.b16 %v1190
    %v1299 = vunpack.c.l.b16 %v1191
    %v1300 = vunpack.c.h.b16 %v1191
    %v1301 = vpack.c.b16 %v1239, %v1237
    %v1302 = vpack.c.b16 %v1240, %v1238
    %v1303 = vpack.c.b16 %v1243, %v1241
    %v1304 = vpack.c.b16 %v1244, %v1242
    %v1305 = vpack.c.b16 %v1247, %v1245
    %v1306 = vpack.c.b16 %v1248, %v1246
    %v1307 = vpack.c.b16 %v1251, %v1249
    %v1308 = vpack.c.b16 %v1252, %v1250
    %v1309 = vpack.c.b16 %v1255, %v1253
    %v1310 = vpack.c.b16 %v1256, %v1254
    %v1311 = vpack.c.b16 %v1259, %v1257
    %v1312 = vpack.c.b16 %v1260, %v1258
    %v1313 = vpack.c.b16 %v1263, %v1261
    %v1314 = vpack.c.b16 %v1264, %v1262
    %v1315 = vpack.c.b16 %v1267, %v1265
    %v1316 = vpack.c.b16 %v1268, %v1266
    %v1317 = vpack.c.b16 %v1271, %v1269
    %v1318 = vpack.c.b16 %v1272, %v1270
    %v1319 = vpack.c.b16 %v1275, %v1273
    %v1320 = vpack.c.b16 %v1276, %v1274
    %v1321 = vpack.c.b16 %v1279, %v1277
    %v1322 = vpack.c.b16 %v1280, %v1278
    %v1323 = vpack.c.b16 %v1283, %v1281
    %v1324 = vpack.c.b16 %v1284, %v1282
    %v1325 = vpack.c.b16 %v1287, %v1285
    %v1326 = vpack.c.b16 %v1288, %v1286
    %v1327 = vpack.c.b16 %v1291, %v1289
    %v1328 = vpack.c.b16 %v1292, %v1290
    %v1329 = vpack.c.b16 %v1295, %v1293
    %v1330 = vpack.c.b16 %v1296, %v1294
    %v1331 = vpack.c.b16 %v1299, %v1297
    %v1332 = vpack.c.b16 %v1300, %v1298
    %1365 = vmatprep.subr.bf16.mxu0 %v1302
    %1366 = vmatpush1.bf16.msra.mxu0 %v1301
    %1367 = vmatprep.subr.bf16.mxu0 %v1304
    %1368 = vmatpush1.bf16.msra.mxu0 %v1303
    %1369 = vmatprep.subr.bf16.mxu0 %v1306
    %1370 = vmatpush1.bf16.msra.mxu0 %v1305
    %1371 = vmatprep.subr.bf16.mxu0 %v1308
    %1372 = vmatpush1.bf16.msra.mxu0 %v1307
    %1373 = vmatprep.subr.bf16.mxu0 %v1310
    %1374 = vmatpush1.bf16.msra.mxu0 %v1309
    %1375 = vmatprep.subr.bf16.mxu0 %v1312
    %1376 = vmatpush1.bf16.msra.mxu0 %v1311
    %1377 = vmatprep.subr.bf16.mxu0 %v1314
    %1378 = vmatpush1.bf16.msra.mxu0 %v1313
    %1379 = vmatprep.subr.bf16.mxu0 %v1316
    %1380 = vmatpush1.bf16.msra.mxu0 %v1315
    %1381 = vmatprep.subr.bf16.mxu0 %v1318
    %1382 = vmatpush1.bf16.msra.mxu0 %v1317
    %1383 = vmatprep.subr.bf16.mxu0 %v1320
    %1384 = vmatpush1.bf16.msra.mxu0 %v1319
    %1385 = vmatprep.subr.bf16.mxu0 %v1322
    %1386 = vmatpush1.bf16.msra.mxu0 %v1321
    %1387 = vmatprep.subr.bf16.mxu0 %v1324
    %1388 = vmatpush1.bf16.msra.mxu0 %v1323
    %1389 = vmatprep.subr.bf16.mxu0 %v1326
    %1390 = vmatpush1.bf16.msra.mxu0 %v1325
    %1391 = vmatprep.subr.bf16.mxu0 %v1328
    %1392 = vmatpush1.bf16.msra.mxu0 %v1327
    %1393 = vmatprep.subr.bf16.mxu0 %v1330
    %1394 = vmatpush1.bf16.msra.mxu0 %v1329
    %1395 = vmatprep.subr.bf16.mxu0 %v1332
    %1396 = vmatpush1.bf16.msra.mxu0 %v1331
    %1397 = vmatprep.mubr.bf16.mxu0 %v1158
    %1398 = vmatmul.mubr.bf16.gmra.mrb[0].mxu0 %v1157
    %v1399 = vpop.f32.mrb[0].mxu0
    %v1400 = vadd.f32 %v1198, %v1399
    %v1401 = vpop.f32.mrb[0].mxu0
    %v1402 = vadd.f32 %v1202, %v1401
    %v1403 = vpop.f32.mrb[0].mxu0
    %v1404 = vpop.f32.mrb[0].mxu0
    %1405 = vdwg.mxu0
    %v1406 = vmax.f32 %v1400, 0.0
    %v1407 = vmax.f32 %v1402, 0.0
    %v1408 = vpack.c.bf16 %v1406, %v1406
    %v1409 = vpack.c.bf16 %v1407, %v1407
    %s1410 = scalar_lea.vmem [#allocation4], 1280
    %v1411 = vld [vmem:[%s1410] sm:$0xff]
    %v1412 = vld [vmem:[%s1410 + $0x8] sm:$0xff]
    %v1413 = vld [vmem:[%s1410 + $0x10] sm:$0xff]
    %v1414 = vld [vmem:[%s1410 + $0x18] sm:$0xff]
    %v1415 = vld [vmem:[%s1410 + $0x20] sm:$0xff]
    %v1416 = vld [vmem:[%s1410 + $0x28] sm:$0xff]
    %v1417 = vld [vmem:[%s1410 + $0x30] sm:$0xff]
    %v1418 = vld [vmem:[%s1410 + $0x38] sm:$0xff]
    %v1419 = vld [vmem:[%s1410 + $0x40] sm:$0xff]
    %v1420 = vld [vmem:[%s1410 + $0x48] sm:$0xff]
    %v1421 = vld [vmem:[%s1410 + $0x50] sm:$0xff]
    %v1422 = vld [vmem:[%s1410 + $0x58] sm:$0xff]
    %v1423 = vld [vmem:[%s1410 + $0x60] sm:$0xff]
    %v1424 = vld [vmem:[%s1410 + $0x68] sm:$0xff]
    %v1425 = vld [vmem:[%s1410 + $0x70] sm:$0xff]
    %v1426 = vld [vmem:[%s1410 + $0x78] sm:$0xff]
    %v1427 = vld [vmem:[%s1410 + $0x80] sm:$0xff]
    %v1428 = vld [vmem:[%s1410 + $0x88] sm:$0xff]
    %v1429 = vld [vmem:[%s1410 + $0x90] sm:$0xff]
    %v1430 = vld [vmem:[%s1410 + $0x98] sm:$0xff]
    %v1431 = vld [vmem:[%s1410 + $0xa0] sm:$0xff]
    %v1432 = vld [vmem:[%s1410 + $0xa8] sm:$0xff]
    %v1433 = vld [vmem:[%s1410 + $0xb0] sm:$0xff]
    %v1434 = vld [vmem:[%s1410 + $0xb8] sm:$0xff]
    %v1435 = vld [vmem:[%s1410 + $0xc0] sm:$0xff]
    %v1436 = vld [vmem:[%s1410 + $0xc8] sm:$0xff]
    %v1437 = vld [vmem:[%s1410 + $0xd0] sm:$0xff]
    %v1438 = vld [vmem:[%s1410 + $0xd8] sm:$0xff]
    %v1439 = vld [vmem:[%s1410 + $0xe0] sm:$0xff]
    %v1440 = vld [vmem:[%s1410 + $0xe8] sm:$0xff]
    %v1441 = vld [vmem:[%s1410 + $0xf0] sm:$0xff]
    %v1442 = vld [vmem:[%s1410 + $0xf8] sm:$0xff]
    %s1443 = scalar_lea.vmem [#allocation6], 10
    %v1444 = vld [vmem:[%s1443] sm:$0x3]
    %v1446 = vlaneseq
    %v1447 = vshrl.u32 %v1446, 7
    %v1448 = vsub.s32 0, %v1447
    %v1449 = vrot.slane %v1444, %v1448
    %v1450 = vlaneseq
    %v1451 = vshrl.u32 %v1450, 7
    %v1452 = vsub.s32 1, %v1451
    %v1453 = vrot.slane %v1444, %v1452
    %v1488 = vunpack.c.l.b16 %v1411
    %v1489 = vunpack.c.h.b16 %v1411
    %v1490 = vunpack.c.l.b16 %v1412
    %v1491 = vunpack.c.h.b16 %v1412
    %v1492 = vunpack.c.l.b16 %v1413
    %v1493 = vunpack.c.h.b16 %v1413
    %v1494 = vunpack.c.l.b16 %v1414
    %v1495 = vunpack.c.h.b16 %v1414
    %v1496 = vunpack.c.l.b16 %v1415
    %v1497 = vunpack.c.h.b16 %v1415
    %v1498 = vunpack.c.l.b16 %v1416
    %v1499 = vunpack.c.h.b16 %v1416
    %v1500 = vunpack.c.l.b16 %v1417
    %v1501 = vunpack.c.h.b16 %v1417
    %v1502 = vunpack.c.l.b16 %v1418
    %v1503 = vunpack.c.h.b16 %v1418
    %v1504 = vunpack.c.l.b16 %v1419
    %v1505 = vunpack.c.h.b16 %v1419
    %v1506 = vunpack.c.l.b16 %v1420
    %v1507 = vunpack.c.h.b16 %v1420
    %v1508 = vunpack.c.l.b16 %v1421
    %v1509 = vunpack.c.h.b16 %v1421
    %v1510 = vunpack.c.l.b16 %v1422
    %v1511 = vunpack.c.h.b16 %v1422
    %v1512 = vunpack.c.l.b16 %v1423
    %v1513 = vunpack.c.h.b16 %v1423
    %v1514 = vunpack.c.l.b16 %v1424
    %v1515 = vunpack.c.h.b16 %v1424
    %v1516 = vunpack.c.l.b16 %v1425
    %v1517 = vunpack.c.h.b16 %v1425
    %v1518 = vunpack.c.l.b16 %v1426
    %v1519 = vunpack.c.h.b16 %v1426
    %v1520 = vunpack.c.l.b16 %v1427
    %v1521 = vunpack.c.h.b16 %v1427
    %v1522 = vunpack.c.l.b16 %v1428
    %v1523 = vunpack.c.h.b16 %v1428
    %v1524 = vunpack.c.l.b16 %v1429
    %v1525 = vunpack.c.h.b16 %v1429
    %v1526 = vunpack.c.l.b16 %v1430
    %v1527 = vunpack.c.h.b16 %v1430
    %v1528 = vunpack.c.l.b16 %v1431
    %v1529 = vunpack.c.h.b16 %v1431
    %v1530 = vunpack.c.l.b16 %v1432
    %v1531 = vunpack.c.h.b16 %v1432
    %v1532 = vunpack.c.l.b16 %v1433
    %v1533 = vunpack.c.h.b16 %v1433
    %v1534 = vunpack.c.l.b16 %v1434
    %v1535 = vunpack.c.h.b16 %v1434
    %v1536 = vunpack.c.l.b16 %v1435
    %v1537 = vunpack.c.h.b16 %v1435
    %v1538 = vunpack.c.l.b16 %v1436
    %v1539 = vunpack.c.h.b16 %v1436
    %v1540 = vunpack.c.l.b16 %v1437
    %v1541 = vunpack.c.h.b16 %v1437
    %v1542 = vunpack.c.l.b16 %v1438
    %v1543 = vunpack.c.h.b16 %v1438
    %v1544 = vunpack.c.l.b16 %v1439
    %v1545 = vunpack.c.h.b16 %v1439
    %v1546 = vunpack.c.l.b16 %v1440
    %v1547 = vunpack.c.h.b16 %v1440
    %v1548 = vunpack.c.l.b16 %v1441
    %v1549 = vunpack.c.h.b16 %v1441
    %v1550 = vunpack.c.l.b16 %v1442
    %v1551 = vunpack.c.h.b16 %v1442
    %v1552 = vpack.c.b16 %v1490, %v1488
    %v1553 = vpack.c.b16 %v1491, %v1489
    %v1554 = vpack.c.b16 %v1494, %v1492
    %v1555 = vpack.c.b16 %v1495, %v1493
    %v1556 = vpack.c.b16 %v1498, %v1496
    %v1557 = vpack.c.b16 %v1499, %v1497
    %v1558 = vpack.c.b16 %v1502, %v1500
    %v1559 = vpack.c.b16 %v1503, %v1501
    %v1560 = vpack.c.b16 %v1506, %v1504
    %v1561 = vpack.c.b16 %v1507, %v1505
    %v1562 = vpack.c.b16 %v1510, %v1508
    %v1563 = vpack.c.b16 %v1511, %v1509
    %v1564 = vpack.c.b16 %v1514, %v1512
    %v1565 = vpack.c.b16 %v1515, %v1513
    %v1566 = vpack.c.b16 %v1518, %v1516
    %v1567 = vpack.c.b16 %v1519, %v1517
    %v1568 = vpack.c.b16 %v1522, %v1520
    %v1569 = vpack.c.b16 %v1523, %v1521
    %v1570 = vpack.c.b16 %v1526, %v1524
    %v1571 = vpack.c.b16 %v1527, %v1525
    %v1572 = vpack.c.b16 %v1530, %v1528
    %v1573 = vpack.c.b16 %v1531, %v1529
    %v1574 = vpack.c.b16 %v1534, %v1532
    %v1575 = vpack.c.b16 %v1535, %v1533
    %v1576 = vpack.c.b16 %v1538, %v1536
    %v1577 = vpack.c.b16 %v1539, %v1537
    %v1578 = vpack.c.b16 %v1542, %v1540
    %v1579 = vpack.c.b16 %v1543, %v1541
    %v1580 = vpack.c.b16 %v1546, %v1544
    %v1581 = vpack.c.b16 %v1547, %v1545
    %v1582 = vpack.c.b16 %v1550, %v1548
    %v1583 = vpack.c.b16 %v1551, %v1549
    %1616 = vmatprep.subr.bf16.mxu0 %v1553
    %1617 = vmatpush1.bf16.msra.mxu0 %v1552
    %1618 = vmatprep.subr.bf16.mxu0 %v1555
    %1619 = vmatpush1.bf16.msra.mxu0 %v1554
    %1620 = vmatprep.subr.bf16.mxu0 %v1557
    %1621 = vmatpush1.bf16.msra.mxu0 %v1556
    %1622 = vmatprep.subr.bf16.mxu0 %v1559
    %1623 = vmatpush1.bf16.msra.mxu0 %v1558
    %1624 = vmatprep.subr.bf16.mxu0 %v1561
    %1625 = vmatpush1.bf16.msra.mxu0 %v1560
    %1626 = vmatprep.subr.bf16.mxu0 %v1563
    %1627 = vmatpush1.bf16.msra.mxu0 %v1562
    %1628 = vmatprep.subr.bf16.mxu0 %v1565
    %1629 = vmatpush1.bf16.msra.mxu0 %v1564
    %1630 = vmatprep.subr.bf16.mxu0 %v1567
    %1631 = vmatpush1.bf16.msra.mxu0 %v1566
    %1632 = vmatprep.subr.bf16.mxu0 %v1569
    %1633 = vmatpush1.bf16.msra.mxu0 %v1568
    %1634 = vmatprep.subr.bf16.mxu0 %v1571
    %1635 = vmatpush1.bf16.msra.mxu0 %v1570
    %1636 = vmatprep.subr.bf16.mxu0 %v1573
    %1637 = vmatpush1.bf16.msra.mxu0 %v1572
    %1638 = vmatprep.subr.bf16.mxu0 %v1575
    %1639 = vmatpush1.bf16.msra.mxu0 %v1574
    %1640 = vmatprep.subr.bf16.mxu0 %v1577
    %1641 = vmatpush1.bf16.msra.mxu0 %v1576
    %1642 = vmatprep.subr.bf16.mxu0 %v1579
    %1643 = vmatpush1.bf16.msra.mxu0 %v1578
    %1644 = vmatprep.subr.bf16.mxu0 %v1581
    %1645 = vmatpush1.bf16.msra.mxu0 %v1580
    %1646 = vmatprep.subr.bf16.mxu0 %v1583
    %1647 = vmatpush1.bf16.msra.mxu0 %v1582
    %1648 = vmatprep.mubr.bf16.mxu0 %v1409
    %1649 = vmatmul.mubr.bf16.gmra.mrb[0].mxu0 %v1408
    %v1650 = vpop.f32.mrb[0].mxu0
    %v1651 = vadd.f32 %v1449, %v1650
    %v1652 = vpop.f32.mrb[0].mxu0
    %v1653 = vadd.f32 %v1453, %v1652
    %v1654 = vpop.f32.mrb[0].mxu0
    %v1655 = vpop.f32.mrb[0].mxu0
    %1656 = vdwg.mxu0
    %v1657 = vmax.f32 %v1651, 0.0
    %v1658 = vmax.f32 %v1653, 0.0
    %v1659 = vpack.c.bf16 %v1657, %v1657
    %v1660 = vpack.c.bf16 %v1658, %v1658
    %v1661 = vld [vmem:[#allocation7] sm:$0xf]
    %v1662 = vld [vmem:[#allocation7 + $0x4] sm:$0xf]
    %v1663 = vld [vmem:[#allocation7 + $0x8] sm:$0xf]
    %v1664 = vld [vmem:[#allocation7 + $0xc] sm:$0xf]
    %v1665 = vld [vmem:[#allocation7 + $0x10] sm:$0xf]
    %v1666 = vld [vmem:[#allocation7 + $0x14] sm:$0xf]
    %v1667 = vld [vmem:[#allocation7 + $0x18] sm:$0xf]
    %v1668 = vld [vmem:[#allocation7 + $0x1c] sm:$0xf]
    %v1669 = vld [vmem:[#allocation7 + $0x20] sm:$0xf]
    %v1670 = vld [vmem:[#allocation7 + $0x24] sm:$0xf]
    %v1671 = vld [vmem:[#allocation7 + $0x28] sm:$0xf]
    %v1672 = vld [vmem:[#allocation7 + $0x2c] sm:$0xf]
    %v1673 = vld [vmem:[#allocation7 + $0x30] sm:$0xf]
    %v1674 = vld [vmem:[#allocation7 + $0x34] sm:$0xf]
    %v1675 = vld [vmem:[#allocation7 + $0x38] sm:$0xf]
    %v1676 = vld [vmem:[#allocation7 + $0x3c] sm:$0xf]
    %v1677 = vld [vmem:[#allocation7 + $0x40] sm:$0xf]
    %v1678 = vld [vmem:[#allocation7 + $0x44] sm:$0xf]
    %v1679 = vld [vmem:[#allocation7 + $0x48] sm:$0xf]
    %v1680 = vld [vmem:[#allocation7 + $0x4c] sm:$0xf]
    %v1681 = vld [vmem:[#allocation7 + $0x50] sm:$0xf]
    %v1682 = vld [vmem:[#allocation7 + $0x54] sm:$0xf]
    %v1683 = vld [vmem:[#allocation7 + $0x58] sm:$0xf]
    %v1684 = vld [vmem:[#allocation7 + $0x5c] sm:$0xf]
    %v1685 = vld [vmem:[#allocation7 + $0x60] sm:$0xf]
    %v1686 = vld [vmem:[#allocation7 + $0x64] sm:$0xf]
    %v1687 = vld [vmem:[#allocation7 + $0x68] sm:$0xf]
    %v1688 = vld [vmem:[#allocation7 + $0x6c] sm:$0xf]
    %v1689 = vld [vmem:[#allocation7 + $0x70] sm:$0xf]
    %v1690 = vld [vmem:[#allocation7 + $0x74] sm:$0xf]
    %v1691 = vld [vmem:[#allocation7 + $0x78] sm:$0xf]
    %v1692 = vld [vmem:[#allocation7 + $0x7c] sm:$0xf]
    %v1693 = vld [vmem:[%s6] sm:$0x1]
    %v1695 = vlaneseq
    %v1696 = vshrl.u32 %v1695, 7
    %v1697 = vsub.s32 0, %v1696
    %v1698 = vrot.slane %v1693, %v1697
    %v1732 = vunpack.c.l.b16 %v1661
    %v1733 = vunpack.c.l.b16 %v1662
    %v1734 = vunpack.c.l.b16 %v1663
    %v1735 = vunpack.c.l.b16 %v1664
    %v1736 = vunpack.c.l.b16 %v1665
    %v1737 = vunpack.c.l.b16 %v1666
    %v1738 = vunpack.c.l.b16 %v1667
    %v1739 = vunpack.c.l.b16 %v1668
    %v1740 = vunpack.c.l.b16 %v1669
    %v1741 = vunpack.c.l.b16 %v1670
    %v1742 = vunpack.c.l.b16 %v1671
    %v1743 = vunpack.c.l.b16 %v1672
    %v1744 = vunpack.c.l.b16 %v1673
    %v1745 = vunpack.c.l.b16 %v1674
    %v1746 = vunpack.c.l.b16 %v1675
    %v1747 = vunpack.c.l.b16 %v1676
    %v1748 = vunpack.c.l.b16 %v1677
    %v1749 = vunpack.c.l.b16 %v1678
    %v1750 = vunpack.c.l.b16 %v1679
    %v1751 = vunpack.c.l.b16 %v1680
    %v1752 = vunpack.c.l.b16 %v1681
    %v1753 = vunpack.c.l.b16 %v1682
    %v1754 = vunpack.c.l.b16 %v1683
    %v1755 = vunpack.c.l.b16 %v1684
    %v1756 = vunpack.c.l.b16 %v1685
    %v1757 = vunpack.c.l.b16 %v1686
    %v1758 = vunpack.c.l.b16 %v1687
    %v1759 = vunpack.c.l.b16 %v1688
    %v1760 = vunpack.c.l.b16 %v1689
    %v1761 = vunpack.c.l.b16 %v1690
    %v1762 = vunpack.c.l.b16 %v1691
    %v1763 = vunpack.c.l.b16 %v1692
    %v1764 = vpack.c.b16 %v1733, %v1732
    %v1765 = vpack.c.b16 %v1735, %v1734
    %v1766 = vpack.c.b16 %v1737, %v1736
    %v1767 = vpack.c.b16 %v1739, %v1738
    %v1768 = vpack.c.b16 %v1741, %v1740
    %v1769 = vpack.c.b16 %v1743, %v1742
    %v1770 = vpack.c.b16 %v1745, %v1744
    %v1771 = vpack.c.b16 %v1747, %v1746
    %v1772 = vpack.c.b16 %v1749, %v1748
    %v1773 = vpack.c.b16 %v1751, %v1750
    %v1774 = vpack.c.b16 %v1753, %v1752
    %v1775 = vpack.c.b16 %v1755, %v1754
    %v1776 = vpack.c.b16 %v1757, %v1756
    %v1777 = vpack.c.b16 %v1759, %v1758
    %v1778 = vpack.c.b16 %v1761, %v1760
    %v1779 = vpack.c.b16 %v1763, %v1762
    %1796 = vmatprep.subr.bf16.mxu0 0
    %1797 = vmatpush1.bf16.msra.mxu0 %v1764
    %1798 = vmatprep.subr.bf16.mxu0 0
    %1799 = vmatpush1.bf16.msra.mxu0 %v1765
    %1800 = vmatprep.subr.bf16.mxu0 0
    %1801 = vmatpush1.bf16.msra.mxu0 %v1766
    %1802 = vmatprep.subr.bf16.mxu0 0
    %1803 = vmatpush1.bf16.msra.mxu0 %v1767
    %1804 = vmatprep.subr.bf16.mxu0 0
    %1805 = vmatpush1.bf16.msra.mxu0 %v1768
    %1806 = vmatprep.subr.bf16.mxu0 0
    %1807 = vmatpush1.bf16.msra.mxu0 %v1769
    %1808 = vmatprep.subr.bf16.mxu0 0
    %1809 = vmatpush1.bf16.msra.mxu0 %v1770
    %1810 = vmatprep.subr.bf16.mxu0 0
    %1811 = vmatpush1.bf16.msra.mxu0 %v1771
    %1812 = vmatprep.subr.bf16.mxu0 0
    %1813 = vmatpush1.bf16.msra.mxu0 %v1772
    %1814 = vmatprep.subr.bf16.mxu0 0
    %1815 = vmatpush1.bf16.msra.mxu0 %v1773
    %1816 = vmatprep.subr.bf16.mxu0 0
    %1817 = vmatpush1.bf16.msra.mxu0 %v1774
    %1818 = vmatprep.subr.bf16.mxu0 0
    %1819 = vmatpush1.bf16.msra.mxu0 %v1775
    %1820 = vmatprep.subr.bf16.mxu0 0
    %1821 = vmatpush1.bf16.msra.mxu0 %v1776
    %1822 = vmatprep.subr.bf16.mxu0 0
    %1823 = vmatpush1.bf16.msra.mxu0 %v1777
    %1824 = vmatprep.subr.bf16.mxu0 0
    %1825 = vmatpush1.bf16.msra.mxu0 %v1778
    %1826 = vmatprep.subr.bf16.mxu0 0
    %1827 = vmatpush1.bf16.msra.mxu0 %v1779
    %1828 = vmatprep.mubr.bf16.mxu0 %v1660
    %1829 = vmatmul.mubr.bf16.gmra.mrb[0].mxu0 %v1659
    %v1830 = vpop.f32.mrb[0].mxu0
    %v1831 = vadd.f32 %v1698, %v1830
    %v1832 = vpop.f32.mrb[0].mxu0
    %v1833 = vpop.f32.mrb[0].mxu0
    %v1834 = vpop.f32.mrb[0].mxu0
    %1835 = vdwg.mxu0
    %1836 = vst [vmem:[%s7] sm:$0xff] %v1831
    // Predicated region
    $region46: #{net_forward_fused.1} parent=1 // pred_check
      _
    $region47: #{net_forward_fused.1} parent=1 // pred_check_branch
      %1838 = sbr.rel (0) target = $region49
    $region48: #{net_forward_fused.1} parent=1 // pred_region
      _
    $region49: #{net_forward_fused.1} parent=1 // pred_fallthru
      _
    // Predicated region
    $region50: #{net_forward_fused.1} parent=1 // pred_check
      _
    $region51: #{net_forward_fused.1} parent=1 // pred_check_branch
      %1840 = sbr.rel (0) target = $region53
    $region52: #{net_forward_fused.1} parent=1 // pred_region
      _
    $region53: #{net_forward_fused.1} parent=1 // pred_fallthru
      _
    %1841 = vsyncpa [#allocation3], 1
    %1842 = vsyncpa [#allocation5], 1
    %1843 = vsyncpa [#allocation8], 1

</llo_original>
